<compile_context>
chip_gen: v7x
topology: tpu7x:2x2x1
jax: 0.10.0
libtpu: 0.0.40
codegen_flags: <defaults>
</compile_context>

<pallas_src>
import functools
import math

import jax
import jax.numpy as jnp
from jax.experimental import pallas as pl
from jax.experimental.pallas import tpu as pltpu


def _round_up(a, m):
    return (a + m - 1) // m * m


def _sage_kernel(a_ref, x_ref, xs_ref, w_ref, b_ref, o_ref, acc_ref, *, relu):
    """One SAGEConv layer: o = [A @ x, x_self] @ Wcat + b (optional ReLU)."""
    k = pl.program_id(1)

    @pl.when(k == 0)
    def _():
        acc_ref[...] = jnp.zeros_like(acc_ref)

    # Mean aggregation (A is row-normalized): bf16 MXU matmul, f32 accumulation.
    acc_ref[...] += jnp.dot(a_ref[...], x_ref[...],
                            preferred_element_type=jnp.float32)

    @pl.when(k == pl.num_programs(1) - 1)
    def _():
        agg = acc_ref[...].astype(jnp.bfloat16)              # (tm, Hp)
        cat = jnp.concatenate([agg, xs_ref[...]], axis=-1)   # (tm, 2*Hp)
        out = jnp.dot(cat, w_ref[...],
                      preferred_element_type=jnp.float32) + b_ref[...]
        if relu:
            out = jnp.maximum(out, 0.0)
        o_ref[...] = out.astype(o_ref.dtype)


def _sage_layer(A, x, wcat, b, *, relu, out_dtype, tile_m, tile_k):
    Np = A.shape[0]
    Hp = x.shape[1]
    grid = (Np // tile_m, Np // tile_k)

    flops = 2 * Np * Np * Hp + 2 * Np * (2 * Hp) * Hp
    bytes_accessed = (A.size * A.dtype.itemsize
                      + grid[0] * x.size * x.dtype.itemsize   # streamed neighbor rows
                      + x.size * x.dtype.itemsize             # resident self rows
                      + Np * Hp * jnp.dtype(out_dtype).itemsize
                      + wcat.size * wcat.dtype.itemsize
                      + b.size * b.dtype.itemsize)

    return pl.pallas_call(
        functools.partial(_sage_kernel, relu=relu),
        out_shape=jax.ShapeDtypeStruct((Np, Hp), out_dtype),
        grid_spec=pltpu.PrefetchScalarGridSpec(
            num_scalar_prefetch=0,
            grid=grid,
            in_specs=[
                pl.BlockSpec((tile_m, tile_k), lambda i, k: (i, k)),  # A tile
                pl.BlockSpec((tile_k, Hp), lambda i, k: (k, 0)),      # neighbor feats
                pl.BlockSpec((tile_m, Hp), lambda i, k: (i, 0)),      # self feats
                pl.BlockSpec((2 * Hp, Hp), lambda i, k: (0, 0)),      # fused [Wl^T; Wr^T]
                pl.BlockSpec((1, Hp), lambda i, k: (0, 0)),           # bias (f32)
            ],
            out_specs=pl.BlockSpec((tile_m, Hp), lambda i, k: (i, 0)),
            scratch_shapes=[pltpu.VMEM((tile_m, Hp), jnp.float32)],
        ),
        compiler_params=pltpu.CompilerParams(
            dimension_semantics=("parallel", "arbitrary"),
            vmem_limit_bytes=32 * 1024 * 1024,
        ),
        cost_estimate=pl.CostEstimate(
            flops=flops, transcendentals=0, bytes_accessed=bytes_accessed),
    )(A, x, x, wcat, b)


def gnn_forward(x, edge_index, params, *, tile_m=256, tile_k=256):
    """x: [N, H] f32; edge_index: [2, E] int32 (row 0 = src j, row 1 = dst i)."""
    N, H = x.shape
    assert tile_m % 8 == 0 and tile_k % 128 == 0
    Hp = _round_up(H, 128)                         # lane-dense feature dim
    Np = _round_up(N, math.lcm(tile_m, tile_k))    # pad nodes to the tile grid

    src, dst = edge_index[0], edge_index[1]
    # Glue (wrapper-side XLA): dense row-normalized adjacency, zero-padded.
    # Padded rows/cols are zero, so they never contaminate real rows.
    # TODO(synk): for large sparse graphs replace the dense A with a CSR-gather
    # kernel (scalar-prefetched row offsets + manual make_async_copy) -> O(E*H).
    adj = jnp.zeros((Np, Np), jnp.float32).at[dst, src].add(1.0)
    deg = adj.sum(axis=1, keepdims=True)
    A = (adj / jnp.maximum(deg, 1.0)).astype(jnp.bfloat16)

    xp = jnp.zeros((Np, Hp), jnp.float32).at[:N, :H].set(x).astype(jnp.bfloat16)

    def pack(wl, wr, bias):
        # Pre-transpose + fuse lin_l / lin_r: rows [0:H] multiply the aggregated
        # features, rows [Hp:Hp+H] multiply the self features; zeros elsewhere.
        wcat = jnp.zeros((2 * Hp, Hp), jnp.float32)
        wcat = wcat.at[:H, :H].set(wl.T)
        wcat = wcat.at[Hp:Hp + H, :H].set(wr.T)
        bp = jnp.zeros((1, Hp), jnp.float32).at[0, :H].set(bias)
        return wcat.astype(jnp.bfloat16), bp

    w1, b1 = pack(params["w1l"], params["w1r"], params["b1"])
    w2, b2 = pack(params["w2l"], params["w2r"], params["b2"])

    h = _sage_layer(A, xp, w1, b1, relu=True, out_dtype=jnp.bfloat16,
                    tile_m=tile_m, tile_k=tile_k)
    y = _sage_layer(A, h, w2, b2, relu=False, out_dtype=jnp.float32,
                    tile_m=tile_m, tile_k=tile_k)
    return y[:N, :H]


def _ref_forward(x, edge_index, params, *, emulate_bf16=False):
    """Plain-JAX scatter-mean SAGEConv reference (PyG semantics).

    With emulate_bf16=True, inputs/weights and intermediates are rounded to
    bf16 at the same points as the kernel (structure stays independent:
    gather/scatter mean, separate lin_l/lin_r, no padding)."""
    N, H = x.shape
    src, dst = edge_index[0], edge_index[1]
    cast = ((lambda a: a.astype(jnp.bfloat16).astype(jnp.float32))
            if emulate_bf16 else (lambda a: a))

    def sage(xin, wl, wr, b):
        xin = cast(xin)
        summed = jnp.zeros((N, H), jnp.float32).at[dst].add(xin[src])
        cnt = jnp.zeros((N,), jnp.float32).at[dst].add(1.0)
        inv = cast(1.0 / jnp.maximum(cnt, 1.0))
        mean = cast(summed * inv[:, None])
        return mean @ cast(wl).T + xin @ cast(wr).T + b

    h = jax.nn.relu(sage(x, params["w1l"], params["w1r"], params["b1"]))
    if emulate_bf16:
        h = h.astype(jnp.bfloat16).astype(jnp.float32)
    return sage(h, params["w2l"], params["w2r"], params["b2"])


if __name__ == "__main__":
    N, H, E = 200, 32, 600   # small demo: 200 nodes, hidden=32, 600 edges

    key = jax.random.PRNGKey(0)
    kx, ke, k1, k2, k3, k4, k5, k6 = jax.random.split(key, 8)

    x = jax.random.normal(kx, (N, H), dtype=jnp.float32)
    edge_index = jax.random.randint(ke, (2, E), 0, N, dtype=jnp.int32)

    scale = 1.0 / jnp.sqrt(jnp.float32(H))
    params = {
        "w1l": jax.random.normal(k1, (H, H), jnp.float32) * scale,  # lin_l weight (out,in)
        "w1r": jax.random.normal(k2, (H, H), jnp.float32) * scale,  # lin_r weight (no bias)
        "b1":  jax.random.normal(k3, (H,), jnp.float32) * 0.1,      # lin_l bias
        "w2l": jax.random.normal(k4, (H, H), jnp.float32) * scale,
        "w2r": jax.random.normal(k5, (H, H), jnp.float32) * scale,
        "b2":  jax.random.normal(k6, (H,), jnp.float32) * 0.1,
    }

    # Small tiles so the demo exercises a real (2, 2) grid; defaults are larger.
    fwd = jax.jit(functools.partial(gnn_forward, tile_m=128, tile_k=128))
    out = jax.block_until_ready(fwd(x, edge_index, params))
    assert out.shape == (N, H)

    # Hard check: bf16-precision-matched, structurally independent reference.
    ref_bf16 = _ref_forward(x, edge_index, params, emulate_bf16=True)
    assert jnp.allclose(out, ref_bf16, atol=2e-2, rtol=2e-2), "mismatch vs bf16 reference"

    # Gross sanity check vs the pure f32 reference (bf16 drift only).
    ref_f32 = _ref_forward(x, edge_index, params)
    assert float(jnp.max(jnp.abs(out - ref_f32))) < 0.25, "gross mismatch vs f32 reference"

    print("KERNEL_OK")
</pallas_src>

<mosaic_0001>
module attributes {stable_mosaic.version = 11 : i64} {
  func.func @_sage_kernel(%arg0: i32, %arg1: i32, %arg2: memref<128x128xbf16, #tpu.memory_space<vmem>>, %arg3: memref<128x128xbf16, #tpu.memory_space<vmem>>, %arg4: memref<128x128xbf16, #tpu.memory_space<vmem>>, %arg5: memref<256x128xbf16, #tpu.memory_space<vmem>>, %arg6: memref<1x128xf32, #tpu.memory_space<vmem>>, %arg7: memref<128x128xf32, #tpu.memory_space<vmem>>, %arg8: memref<128x128xf32, #tpu.memory_space<vmem>>) attributes {dimension_semantics = [#tpu.dimension_semantics<parallel>, #tpu.dimension_semantics<arbitrary>], iteration_bounds = array<i64: 2, 2>, scalar_prefetch = 0 : i64, scratch_operands = 1 : i64, tpu.core_type = #tpu.core_type<tc>, window_params = [{transform_indices = @transform_0, window_bounds = array<i64: 128, 128>}, {transform_indices = @transform_1, window_bounds = array<i64: 128, 128>}, {transform_indices = @transform_2, window_bounds = array<i64: 128, 128>}, {pipeline_mode = #tpu.pipeline_mode<synchronous>, transform_indices = @transform_3, window_bounds = array<i64: 256, 128>}, {pipeline_mode = #tpu.pipeline_mode<synchronous>, transform_indices = @transform_4, window_bounds = array<i64: 1, 128>}, {transform_indices = @transform_5, window_bounds = array<i64: 128, 128>}]} {
    %c0_i32 = arith.constant 0 : i32
    %0 = arith.cmpi eq, %arg1, %c0_i32 : i32
    %1 = arith.extui %0 : i1 to i32
    %c0_i32_0 = arith.constant 0 : i32
    %2 = arith.cmpi ne, %1, %c0_i32_0 : i32
    scf.if %2 {
      %cst_9 = arith.constant 0.000000e+00 : f32
      %12 = vector.broadcast %cst_9 : f32 to vector<128x128xf32>
      %c0_10 = arith.constant 0 : index
      %c0_11 = arith.constant 0 : index
      %13 = vector.load %arg8[%c0_10, %c0_11] : memref<128x128xf32, #tpu.memory_space<vmem>>, vector<128x128xf32>
      tpu.vector_store %arg8[%c0_10, %c0_11], %12 {strides = array<i32>} : memref<128x128xf32, #tpu.memory_space<vmem>>, vector<128x128xf32>,
    } else {
    }
    %c0 = arith.constant 0 : index
    %c0_1 = arith.constant 0 : index
    %3 = vector.load %arg8[%c0, %c0_1] : memref<128x128xf32, #tpu.memory_space<vmem>>, vector<128x128xf32>
    %c0_2 = arith.constant 0 : index
    %c0_3 = arith.constant 0 : index
    %4 = vector.load %arg2[%c0_2, %c0_3] : memref<128x128xbf16, #tpu.memory_space<vmem>>, vector<128x128xbf16>
    %c0_4 = arith.constant 0 : index
    %c0_5 = arith.constant 0 : index
    %5 = vector.load %arg3[%c0_4, %c0_5] : memref<128x128xbf16, #tpu.memory_space<vmem>>, vector<128x128xbf16>
    %cst = arith.constant dense<0.000000e+00> : vector<128x128xf32>
    %6 = tpu.matmul %4, %5, %cst {dimension_numbers = #tpu.dot_dimension_numbers<[1], [0], [0], [1], [0, 0, 1, 1], [], []>} : vector<128x128xbf16>, vector<128x128xbf16>, vector<128x128xf32> -> vector<128x128xf32>
    %7 = arith.addf %3, %6 : vector<128x128xf32>
    %c0_6 = arith.constant 0 : index
    %c0_7 = arith.constant 0 : index
    %8 = vector.load %arg8[%c0_6, %c0_7] : memref<128x128xf32, #tpu.memory_space<vmem>>, vector<128x128xf32>
    tpu.vector_store %arg8[%c0_6, %c0_7], %7 {strides = array<i32>} : memref<128x128xf32, #tpu.memory_space<vmem>>, vector<128x128xf32>,
    %c1_i32 = arith.constant 1 : i32
    %9 = arith.cmpi eq, %arg1, %c1_i32 : i32
    %10 = arith.extui %9 : i1 to i32
    %c0_i32_8 = arith.constant 0 : i32
    %11 = arith.cmpi ne, %10, %c0_i32_8 : i32
    scf.if %11 {
      %c0_9 = arith.constant 0 : index
      %c0_10 = arith.constant 0 : index
      %12 = vector.load %arg8[%c0_9, %c0_10] : memref<128x128xf32, #tpu.memory_space<vmem>>, vector<128x128xf32>
      %13 = arith.truncf %12 : vector<128x128xf32> to vector<128x128xbf16>
      %c0_11 = arith.constant 0 : index
      %c0_12 = arith.constant 0 : index
      %14 = vector.load %arg4[%c0_11, %c0_12] : memref<128x128xbf16, #tpu.memory_space<vmem>>, vector<128x128xbf16>
      %15 = tpu.concatenate %13, %14 in 1 : vector<128x128xbf16>, vector<128x128xbf16> -> vector<128x256xbf16>
      %c0_13 = arith.constant 0 : index
      %c0_14 = arith.constant 0 : index
      %16 = vector.load %arg5[%c0_13, %c0_14] : memref<256x128xbf16, #tpu.memory_space<vmem>>, vector<256x128xbf16>
      %cst_15 = arith.constant dense<0.000000e+00> : vector<128x128xf32>
      %17 = tpu.matmul %15, %16, %cst_15 {dimension_numbers = #tpu.dot_dimension_numbers<[1], [0], [0], [1], [0, 0, 1, 1], [], []>} : vector<128x256xbf16>, vector<256x128xbf16>, vector<128x128xf32> -> vector<128x128xf32>
      %c0_16 = arith.constant 0 : index
      %c0_17 = arith.constant 0 : index
      %18 = vector.load %arg6[%c0_16, %c0_17] : memref<1x128xf32, #tpu.memory_space<vmem>>, vector<1x128xf32>
      %19 = vector.broadcast %18 : vector<1x128xf32> to vector<128x128xf32>
      %20 = arith.addf %17, %19 : vector<128x128xf32>
      %c0_18 = arith.constant 0 : index
      %c0_19 = arith.constant 0 : index
      %21 = vector.load %arg7[%c0_18, %c0_19] : memref<128x128xf32, #tpu.memory_space<vmem>>, vector<128x128xf32>
      tpu.vector_store %arg7[%c0_18, %c0_19], %20 {strides = array<i32>} : memref<128x128xf32, #tpu.memory_space<vmem>>, vector<128x128xf32>,
    } else {
    }
    return
  }
  func.func @transform_0(%arg0: i32, %arg1: i32) -> (i32, i32) {
    %c0_i32 = arith.constant 0 : i32
    return %arg0, %arg1 : i32, i32
  }
  func.func @transform_1(%arg0: i32, %arg1: i32) -> (i32, i32) {
    %c0_i32 = arith.constant 0 : i32
    %c0_i32_0 = arith.constant 0 : i32
    return %arg1, %c0_i32 : i32, i32
  }
  func.func @transform_2(%arg0: i32, %arg1: i32) -> (i32, i32) {
    %c0_i32 = arith.constant 0 : i32
    %c0_i32_0 = arith.constant 0 : i32
    return %arg0, %c0_i32 : i32, i32
  }
  func.func @transform_3(%arg0: i32, %arg1: i32) -> (i32, i32) {
    %c0_i32 = arith.constant 0 : i32
    %c0_i32_0 = arith.constant 0 : i32
    %c0_i32_1 = arith.constant 0 : i32
    return %c0_i32, %c0_i32_0 : i32, i32
  }
  func.func @transform_4(%arg0: i32, %arg1: i32) -> (i32, i32) {
    %c0_i32 = arith.constant 0 : i32
    %c0_i32_0 = arith.constant 0 : i32
    %c0_i32_1 = arith.constant 0 : i32
    return %c0_i32, %c0_i32_0 : i32, i32
  }
  func.func @transform_5(%arg0: i32, %arg1: i32) -> (i32, i32) {
    %c0_i32 = arith.constant 0 : i32
    %c0_i32_0 = arith.constant 0 : i32
    return %arg0, %c0_i32 : i32, i32
  }
}

module attributes {stable_mosaic.version = 11 : i64} {
  func.func @_sage_kernel(%arg0: i32, %arg1: i32, %arg2: memref<128x128xbf16, #tpu.memory_space<vmem>>, %arg3: memref<128x128xbf16, #tpu.memory_space<vmem>>, %arg4: memref<128x128xbf16, #tpu.memory_space<vmem>>, %arg5: memref<256x128xbf16, #tpu.memory_space<vmem>>, %arg6: memref<1x128xf32, #tpu.memory_space<vmem>>, %arg7: memref<128x128xbf16, #tpu.memory_space<vmem>>, %arg8: memref<128x128xf32, #tpu.memory_space<vmem>>) attributes {dimension_semantics = [#tpu.dimension_semantics<parallel>, #tpu.dimension_semantics<arbitrary>], iteration_bounds = array<i64: 2, 2>, scalar_prefetch = 0 : i64, scratch_operands = 1 : i64, tpu.core_type = #tpu.core_type<tc>, window_params = [{transform_indices = @transform_0, window_bounds = array<i64: 128, 128>}, {transform_indices = @transform_1, window_bounds = array<i64: 128, 128>}, {transform_indices = @transform_2, window_bounds = array<i64: 128, 128>}, {pipeline_mode = #tpu.pipeline_mode<synchronous>, transform_indices = @transform_3, window_bounds = array<i64: 256, 128>}, {pipeline_mode = #tpu.pipeline_mode<synchronous>, transform_indices = @transform_4, window_bounds = array<i64: 1, 128>}, {transform_indices = @transform_5, window_bounds = array<i64: 128, 128>}]} {
    %c0_i32 = arith.constant 0 : i32
    %0 = arith.cmpi eq, %arg1, %c0_i32 : i32
    %1 = arith.extui %0 : i1 to i32
    %c0_i32_0 = arith.constant 0 : i32
    %2 = arith.cmpi ne, %1, %c0_i32_0 : i32
    scf.if %2 {
      %cst_9 = arith.constant 0.000000e+00 : f32
      %12 = vector.broadcast %cst_9 : f32 to vector<128x128xf32>
      %c0_10 = arith.constant 0 : index
      %c0_11 = arith.constant 0 : index
      %13 = vector.load %arg8[%c0_10, %c0_11] : memref<128x128xf32, #tpu.memory_space<vmem>>, vector<128x128xf32>
      tpu.vector_store %arg8[%c0_10, %c0_11], %12 {strides = array<i32>} : memref<128x128xf32, #tpu.memory_space<vmem>>, vector<128x128xf32>,
    } else {
    }
    %c0 = arith.constant 0 : index
    %c0_1 = arith.constant 0 : index
    %3 = vector.load %arg8[%c0, %c0_1] : memref<128x128xf32, #tpu.memory_space<vmem>>, vector<128x128xf32>
    %c0_2 = arith.constant 0 : index
    %c0_3 = arith.constant 0 : index
    %4 = vector.load %arg2[%c0_2, %c0_3] : memref<128x128xbf16, #tpu.memory_space<vmem>>, vector<128x128xbf16>
    %c0_4 = arith.constant 0 : index
    %c0_5 = arith.constant 0 : index
    %5 = vector.load %arg3[%c0_4, %c0_5] : memref<128x128xbf16, #tpu.memory_space<vmem>>, vector<128x128xbf16>
    %cst = arith.constant dense<0.000000e+00> : vector<128x128xf32>
    %6 = tpu.matmul %4, %5, %cst {dimension_numbers = #tpu.dot_dimension_numbers<[1], [0], [0], [1], [0, 0, 1, 1], [], []>} : vector<128x128xbf16>, vector<128x128xbf16>, vector<128x128xf32> -> vector<128x128xf32>
    %7 = arith.addf %3, %6 : vector<128x128xf32>
    %c0_6 = arith.constant 0 : index
    %c0_7 = arith.constant 0 : index
    %8 = vector.load %arg8[%c0_6, %c0_7] : memref<128x128xf32, #tpu.memory_space<vmem>>, vector<128x128xf32>
    tpu.vector_store %arg8[%c0_6, %c0_7], %7 {strides = array<i32>} : memref<128x128xf32, #tpu.memory_space<vmem>>, vector<128x128xf32>,
    %c1_i32 = arith.constant 1 : i32
    %9 = arith.cmpi eq, %arg1, %c1_i32 : i32
    %10 = arith.extui %9 : i1 to i32
    %c0_i32_8 = arith.constant 0 : i32
    %11 = arith.cmpi ne, %10, %c0_i32_8 : i32
    scf.if %11 {
      %c0_9 = arith.constant 0 : index
      %c0_10 = arith.constant 0 : index
      %12 = vector.load %arg8[%c0_9, %c0_10] : memref<128x128xf32, #tpu.memory_space<vmem>>, vector<128x128xf32>
      %13 = arith.truncf %12 : vector<128x128xf32> to vector<128x128xbf16>
      %c0_11 = arith.constant 0 : index
      %c0_12 = arith.constant 0 : index
      %14 = vector.load %arg4[%c0_11, %c0_12] : memref<128x128xbf16, #tpu.memory_space<vmem>>, vector<128x128xbf16>
      %15 = tpu.concatenate %13, %14 in 1 : vector<128x128xbf16>, vector<128x128xbf16> -> vector<128x256xbf16>
      %c0_13 = arith.constant 0 : index
      %c0_14 = arith.constant 0 : index
      %16 = vector.load %arg5[%c0_13, %c0_14] : memref<256x128xbf16, #tpu.memory_space<vmem>>, vector<256x128xbf16>
      %cst_15 = arith.constant dense<0.000000e+00> : vector<128x128xf32>
      %17 = tpu.matmul %15, %16, %cst_15 {dimension_numbers = #tpu.dot_dimension_numbers<[1], [0], [0], [1], [0, 0, 1, 1], [], []>} : vector<128x256xbf16>, vector<256x128xbf16>, vector<128x128xf32> -> vector<128x128xf32>
      %c0_16 = arith.constant 0 : index
      %c0_17 = arith.constant 0 : index
      %18 = vector.load %arg6[%c0_16, %c0_17] : memref<1x128xf32, #tpu.memory_space<vmem>>, vector<1x128xf32>
      %19 = vector.broadcast %18 : vector<1x128xf32> to vector<128x128xf32>
      %20 = arith.addf %17, %19 : vector<128x128xf32>
      %cst_18 = arith.constant 0.000000e+00 : f32
      %21 = vector.broadcast %cst_18 : f32 to vector<128x128xf32>
      %22 = arith.maximumf %20, %21 : vector<128x128xf32>
      %23 = arith.truncf %22 : vector<128x128xf32> to vector<128x128xbf16>
      %c0_19 = arith.constant 0 : index
      %c0_20 = arith.constant 0 : index
      %24 = vector.load %arg7[%c0_19, %c0_20] : memref<128x128xbf16, #tpu.memory_space<vmem>>, vector<128x128xbf16>
      tpu.vector_store %arg7[%c0_19, %c0_20], %23 {strides = array<i32>} : memref<128x128xbf16, #tpu.memory_space<vmem>>, vector<128x128xbf16>,
    } else {
    }
    return
  }
  func.func @transform_0(%arg0: i32, %arg1: i32) -> (i32, i32) {
    %c0_i32 = arith.constant 0 : i32
    return %arg0, %arg1 : i32, i32
  }
  func.func @transform_1(%arg0: i32, %arg1: i32) -> (i32, i32) {
    %c0_i32 = arith.constant 0 : i32
    %c0_i32_0 = arith.constant 0 : i32
    return %arg1, %c0_i32 : i32, i32
  }
  func.func @transform_2(%arg0: i32, %arg1: i32) -> (i32, i32) {
    %c0_i32 = arith.constant 0 : i32
    %c0_i32_0 = arith.constant 0 : i32
    return %arg0, %c0_i32 : i32, i32
  }
  func.func @transform_3(%arg0: i32, %arg1: i32) -> (i32, i32) {
    %c0_i32 = arith.constant 0 : i32
    %c0_i32_0 = arith.constant 0 : i32
    %c0_i32_1 = arith.constant 0 : i32
    return %c0_i32, %c0_i32_0 : i32, i32
  }
  func.func @transform_4(%arg0: i32, %arg1: i32) -> (i32, i32) {
    %c0_i32 = arith.constant 0 : i32
    %c0_i32_0 = arith.constant 0 : i32
    %c0_i32_1 = arith.constant 0 : i32
    return %c0_i32, %c0_i32_0 : i32, i32
  }
  func.func @transform_5(%arg0: i32, %arg1: i32) -> (i32, i32) {
    %c0_i32 = arith.constant 0 : i32
    %c0_i32_0 = arith.constant 0 : i32
    return %arg0, %c0_i32 : i32, i32
  }
}

</mosaic_0001>

<llo_original>
// kernel: gnn_forward.3
$region0: #{gnn_forward.3}
  #allocation0 [shape = 'u32[]', space=smem, size = 0x4, offset = 0x4, fixed_abs, tag = 'smem constant byte address 0x4 - core index']
  #allocation1 [shape = 'u32[144,128]{1,0:T(1,128)}', space=vmem, size = 0x12000, scoped, tag = 'internal scratch']
  #allocation2 [shape = 'f32[128,128]{1,0:T(8,128)}', space=vmem, size = 0x10000, scoped, tag = 'scratch operand']
  %s0 = inlined_call_operand.vmem [shape: bf16[256,256], index: 0, kind: input, shape index: {}]
  %s1 = inlined_call_operand.vmem [shape: bf16[256,128], index: 1, kind: input, shape index: {}, may-alias: {1,2}]
  %s2 = inlined_call_operand.vmem [shape: bf16[256,128], index: 2, kind: input, shape index: {}, may-alias: {1,2}]
  %s3 = inlined_call_operand.vmem [shape: bf16[256,128], index: 3, kind: input, shape index: {}]
  %s4 = inlined_call_operand.vmem [shape: f32[1,128], index: 4, kind: input, shape index: {}]
  %s5 = inlined_call_operand.vmem [shape: f32[256,128], index: 5, kind: output, shape index: {}]
  %s6 = sld [smem:[#allocation0]]
  $region102: #{gnn_forward.3} parent=0
    _
  %s8 = ssub.s32 1, %s6
  %s9 = scalar_select 0, %s8, %s6
  $region1: #{gnn_forward.3} parent=0
    #allocation3 [shape = 'u8[65536]{0}', space=vmem, size = 0x10000, scoped, tag = 'input window, operand 0']
    loop: start=0, step=1, limit=6
    $region2: #{gnn_forward.3} parent=1 // loop_pre_header
      _
    $region3: #{gnn_forward.3} parent=1 // loop_header
      %s11 = sphi 0, %s15
      %p12 = scmp.ge.s32.totalorder %s11, 6
      %s18 = sphi 0, %s30
      %s19 = sphi 0, %s26
      %s20 = sphi 0, %s18
      %s21 = sphi 0, %s19
      %s22 = sphi 0, %s20
      %s23 = sphi 0, %s21
      %s35 = sphi 0, %s37
      %s38 = sphi 0, %s35
      %s39 = sphi 0, %s38
      %s55 = sphi 0, %s39
      %s61 = sphi 0, %s63
      %s64 = sphi 0, %s61
      %s65 = sphi 0, %s64
      %s81 = sphi 0, %s65
      %s87 = sphi 0, %s89
      %s90 = sphi 0, %s87
      %s91 = sphi 0, %s90
      %s107 = sphi 0, %s91
      %s111 = sphi 0, %s111
      %s113 = sphi 0, %s111
      %s114 = sphi 0, %s113
      %s128 = sphi 0, %s114
      %s132 = sphi 0, %s132
      %s134 = sphi 0, %s132
      %s135 = sphi 0, %s134
      %s149 = sphi 0, %s135
      %s155 = sphi 0, %s157
      %s158 = sphi 0, %s155
      %s159 = sphi 0, %s158
      %s175 = sphi 0, %s159
    $region4: #{gnn_forward.3} parent=1 // loop_header_branch
      %14 = sbr.rel (%p12) target = $region8
    $region5: #{gnn_forward.3} parent=1 // loop_body
      %s16 = ssub.s32 %s11, 1
      %s17 = ssub.s32 %s11, 2
      %s24 = sadd.s32 1, %s19
      %p25 = scmp.ge.s32.totalorder %s24, 2
      %s26 = scalar_select %p25, 0, %s24
      %s27 = sadd.s32 1, %s18
      %s28 = scalar_select %p25, %s27, %s18
      %p29 = scmp.ge.s32.totalorder %s28, 2
      %s30 = scalar_select %p29, 0, %s28
      %s31 = ssub.s32 %s18, %s30
      %s32 = ssub.s32 %s19, %s26
      %s33 = sor.u32 %s31, %s32
      %p34 = scmp.eq.s32.totalorder %s33, 0
      %s36 = sadd.s32 %s35, 1
      %s37 = scalar_select %p34, %s35, %s36
      %p40 = pneg %p34
      %p41 = scmp.eq.s32.totalorder %s11, 3
      %p42 = por %p40, %p41
      %p43 = scmp.ne.s32.totalorder %s35, %s38
      %p44 = scmp.eq.s32.totalorder %s11, 0
      %p45 = por %p43, %p44
      %p46 = scmp.ne.s32.totalorder %s35, %s38
      %p47 = scmp.eq.s32.totalorder %s16, 3
      %p48 = por %p46, %p47
      %p49 = scmp.ne.s32.totalorder %s38, %s39
      %p50 = scmp.eq.s32.totalorder %s16, 0
      %p51 = por %p49, %p50
      %p52 = scmp.ne.s32.totalorder %s38, %s39
      %p53 = scmp.eq.s32.totalorder %s17, 3
      %p54 = por %p52, %p53
      %p56 = scmp.ne.s32.totalorder %s39, %s55
      %p57 = scmp.eq.s32.totalorder %s17, 0
      %p58 = por %p56, %p57
      %s59 = ssub.s32 %s19, %s26
      %p60 = scmp.eq.s32.totalorder %s59, 0
      %s62 = sadd.s32 %s61, 1
      %s63 = scalar_select %p60, %s61, %s62
      %p66 = pneg %p60
      %p67 = scmp.eq.s32.totalorder %s11, 3
      %p68 = por %p66, %p67
      %p69 = scmp.ne.s32.totalorder %s61, %s64
      %p70 = scmp.eq.s32.totalorder %s11, 0
      %p71 = por %p69, %p70
      %p72 = scmp.ne.s32.totalorder %s61, %s64
      %p73 = scmp.eq.s32.totalorder %s16, 3
      %p74 = por %p72, %p73
      %p75 = scmp.ne.s32.totalorder %s64, %s65
      %p76 = scmp.eq.s32.totalorder %s16, 0
      %p77 = por %p75, %p76
      %p78 = scmp.ne.s32.totalorder %s64, %s65
      %p79 = scmp.eq.s32.totalorder %s17, 3
      %p80 = por %p78, %p79
      %p82 = scmp.ne.s32.totalorder %s65, %s81
      %p83 = scmp.eq.s32.totalorder %s17, 0
      %p84 = por %p82, %p83
      %s85 = ssub.s32 %s18, %s30
      %p86 = scmp.eq.s32.totalorder %s85, 0
      %s88 = sadd.s32 %s87, 1
      %s89 = scalar_select %p86, %s87, %s88
      %p92 = pneg %p86
      %p93 = scmp.eq.s32.totalorder %s11, 3
      %p94 = por %p92, %p93
      %p95 = scmp.ne.s32.totalorder %s87, %s90
      %p96 = scmp.eq.s32.totalorder %s11, 0
      %p97 = por %p95, %p96
      %p98 = scmp.ne.s32.totalorder %s87, %s90
      %p99 = scmp.eq.s32.totalorder %s16, 3
      %p100 = por %p98, %p99
      %p101 = scmp.ne.s32.totalorder %s90, %s91
      %p102 = scmp.eq.s32.totalorder %s16, 0
      %p103 = por %p101, %p102
      %p104 = scmp.ne.s32.totalorder %s90, %s91
      %p105 = scmp.eq.s32.totalorder %s17, 3
      %p106 = por %p104, %p105
      %p108 = scmp.ne.s32.totalorder %s91, %s107
      %p109 = scmp.eq.s32.totalorder %s17, 0
      %p110 = por %p108, %p109
      %s112 = sadd.s32 %s111, 1
      %p115 = scmp.eq.s32.totalorder %s11, 3
      %p116 = scmp.ne.s32.totalorder %s111, %s113
      %p117 = scmp.eq.s32.totalorder %s11, 0
      %p118 = por %p116, %p117
      %p119 = scmp.ne.s32.totalorder %s111, %s113
      %p120 = scmp.eq.s32.totalorder %s16, 3
      %p121 = por %p119, %p120
      %p122 = scmp.ne.s32.totalorder %s113, %s114
      %p123 = scmp.eq.s32.totalorder %s16, 0
      %p124 = por %p122, %p123
      %p125 = scmp.ne.s32.totalorder %s113, %s114
      %p126 = scmp.eq.s32.totalorder %s17, 3
      %p127 = por %p125, %p126
      %p129 = scmp.ne.s32.totalorder %s114, %s128
      %p130 = scmp.eq.s32.totalorder %s17, 0
      %p131 = por %p129, %p130
      %s133 = sadd.s32 %s132, 1
      %p136 = scmp.eq.s32.totalorder %s11, 3
      %p137 = scmp.ne.s32.totalorder %s132, %s134
      %p138 = scmp.eq.s32.totalorder %s11, 0
      %p139 = por %p137, %p138
      %p140 = scmp.ne.s32.totalorder %s132, %s134
      %p141 = scmp.eq.s32.totalorder %s16, 3
      %p142 = por %p140, %p141
      %p143 = scmp.ne.s32.totalorder %s134, %s135
      %p144 = scmp.eq.s32.totalorder %s16, 0
      %p145 = por %p143, %p144
      %p146 = scmp.ne.s32.totalorder %s134, %s135
      %p147 = scmp.eq.s32.totalorder %s17, 3
      %p148 = por %p146, %p147
      %p150 = scmp.ne.s32.totalorder %s135, %s149
      %p151 = scmp.eq.s32.totalorder %s17, 0
      %p152 = por %p150, %p151
      %s153 = ssub.s32 %s18, %s30
      %p154 = scmp.eq.s32.totalorder %s153, 0
      %s156 = sadd.s32 %s155, 1
      %s157 = scalar_select %p154, %s155, %s156
      %p160 = pneg %p154
      %p161 = scmp.eq.s32.totalorder %s11, 3
      %p162 = por %p160, %p161
      %p163 = scmp.ne.s32.totalorder %s155, %s158
      %p164 = scmp.eq.s32.totalorder %s11, 0
      %p165 = por %p163, %p164
      %p166 = scmp.ne.s32.totalorder %s155, %s158
      %p167 = scmp.eq.s32.totalorder %s16, 3
      %p168 = por %p166, %p167
      %p169 = scmp.ne.s32.totalorder %s158, %s159
      %p170 = scmp.eq.s32.totalorder %s16, 0
      %p171 = por %p169, %p170
      %p172 = scmp.ne.s32.totalorder %s158, %s159
      %p173 = scmp.eq.s32.totalorder %s17, 3
      %p174 = por %p172, %p173
      %p176 = scmp.ne.s32.totalorder %s159, %s175
      %p177 = scmp.eq.s32.totalorder %s17, 0
      %p178 = por %p176, %p177
      %p179 = scmp.le.s32.totalorder 1, %s11
      %p180 = scmp.lt.s32.totalorder %s11, 5
      %p181 = pnand %p179, %p180
      %p182 = pneg %p181
      // Predicated region
      $region9: #{gnn_forward.3} parent=5 // pred_check
        _
      $region10: #{gnn_forward.3} parent=5 // pred_check_branch
        %184 = sbr.rel (%p181) target = $region12
      $region11: #{gnn_forward.3} parent=5 // pred_region
        %s185 = ssub.s32 %s11, 1
        // Predicated region
        $region13: #{gnn_forward.3} parent=11 // pred_check
          %p186 = pneg %p124
        $region14: #{gnn_forward.3} parent=11 // pred_check_branch
          %188 = sbr.rel (%p186) target = $region16
        $region15: #{gnn_forward.3} parent=11 // pred_region
          _
        $region16: #{gnn_forward.3} parent=11 // pred_fallthru
          _
        // Predicated region
        $region17: #{gnn_forward.3} parent=11 // pred_check
          %p189 = pneg %p145
        $region18: #{gnn_forward.3} parent=11 // pred_check_branch
          %191 = sbr.rel (%p189) target = $region20
        $region19: #{gnn_forward.3} parent=11 // pred_region
          _
        $region20: #{gnn_forward.3} parent=11 // pred_fallthru
          _
      $region12: #{gnn_forward.3} parent=5 // pred_fallthru
        _
      %p192 = scmp.lt.s32.totalorder %s11, 4
      // Predicated region
      $region21: #{gnn_forward.3} parent=5 // pred_check
        %p193 = pneg %p192
      $region22: #{gnn_forward.3} parent=5 // pred_check_branch
        %195 = sbr.rel (%p193) target = $region24
      $region23: #{gnn_forward.3} parent=5 // pred_region
        // Predicated region
        $region25: #{gnn_forward.3} parent=23 // pred_check
          %p196 = pneg %p45
        $region26: #{gnn_forward.3} parent=23 // pred_check_branch
          %198 = sbr.rel (%p196) target = $region28
        $region27: #{gnn_forward.3} parent=23 // pred_region
          %s199 = sand.u32 %s35, 1
          %s200 = sand.u32 %s35, 1
          %s201 = smul.addr %s200, 64
          %s202 = scalar_lea.vmem [#allocation3], %s201
          %s203 = smul.u32 16, %s18
          %s204 = smul.addr %s203, 2
          %s205 = sadd.s32 %s19, %s204
          %s206 = smul.addr %s205, 4
          %s207 = scalar_lea.vmem %s0, %s206
          // Predicated region
          $region29: #{gnn_forward.3} parent=27 // pred_check
            _
          $region30: #{gnn_forward.3} parent=27 // pred_check_branch
            %209 = sbr.rel (0) target = $region32
          $region31: #{gnn_forward.3} parent=27 // pred_region
            // Predicated region
            $region33: #{gnn_forward.3} parent=31 // pred_check
              _
            $region34: #{gnn_forward.3} parent=31 // pred_check_branch
              %211 = sbr.rel target = $region36
            $region35: #{gnn_forward.3} parent=31 // pred_region
              // Predicated region
              $region48: #{gnn_forward.3} parent=35 // pred_check
                _
              $region49: #{gnn_forward.3} parent=35 // pred_check_branch
                %256 = sbr.rel (0) target = $region51
              $region50: #{gnn_forward.3} parent=35 // pred_region
                loop: start=0, step=1, limit=1
                $region52: #{gnn_forward.3} parent=50 // loop_pre_header
                  _
                $region53: #{gnn_forward.3} parent=50 // loop_header
                  %s258 = sphi 0, %s262
                  %p259 = scmp.ge.s32.totalorder %s258, 1
                  %s263 = sphi %s207, %s207
                  %s264 = sphi %s202, %s202
                $region54: #{gnn_forward.3} parent=50 // loop_header_branch
                  %261 = sbr.rel (%p259) target = $region58
                $region55: #{gnn_forward.3} parent=50 // loop_body
                  _
                $region56: #{gnn_forward.3} parent=50 // loop_footer
                  %s262 = sadd.s32 1, %s258
                $region57: #{gnn_forward.3} parent=50 // loop_footer_branch
                  %257 = sbr.rel target = $region53
                $region58: #{gnn_forward.3} parent=50 // loop_exit
                  _
                loop: start=0, step=1, limit=1
                $region59: #{gnn_forward.3} parent=50 // loop_pre_header
                  _
                $region60: #{gnn_forward.3} parent=50 // loop_header
                  %s267 = sphi 0, %s271
                  %p268 = scmp.ge.s32.totalorder %s267, 1
                  %s272 = sphi %s207, %s207
                  %s273 = sphi %s202, %s202
                $region61: #{gnn_forward.3} parent=50 // loop_header_branch
                  %270 = sbr.rel (%p268) target = $region65
                $region62: #{gnn_forward.3} parent=50 // loop_body
                  %v274 = vld [vmem:[%s272] sm:$0xf]
                  %275 = vst [vmem:[%s273] sm:$0xf] %v274
                  %v276 = vld [vmem:[%s272 + $0x8] sm:$0xf]
                  %277 = vst [vmem:[%s273 + $0x4] sm:$0xf] %v276
                  %v278 = vld [vmem:[%s272 + $0x10] sm:$0xf]
                  %279 = vst [vmem:[%s273 + $0x8] sm:$0xf] %v278
                  %v280 = vld [vmem:[%s272 + $0x18] sm:$0xf]
                  %281 = vst [vmem:[%s273 + $0xc] sm:$0xf] %v280
                  %v282 = vld [vmem:[%s272 + $0x20] sm:$0xf]
                  %283 = vst [vmem:[%s273 + $0x10] sm:$0xf] %v282
                  %v284 = vld [vmem:[%s272 + $0x28] sm:$0xf]
                  %285 = vst [vmem:[%s273 + $0x14] sm:$0xf] %v284
                  %v286 = vld [vmem:[%s272 + $0x30] sm:$0xf]
                  %287 = vst [vmem:[%s273 + $0x18] sm:$0xf] %v286
                  %v288 = vld [vmem:[%s272 + $0x38] sm:$0xf]
                  %289 = vst [vmem:[%s273 + $0x1c] sm:$0xf] %v288
                  %v290 = vld [vmem:[%s272 + $0x40] sm:$0xf]
                  %291 = vst [vmem:[%s273 + $0x20] sm:$0xf] %v290
                  %v292 = vld [vmem:[%s272 + $0x48] sm:$0xf]
                  %293 = vst [vmem:[%s273 + $0x24] sm:$0xf] %v292
                  %v294 = vld [vmem:[%s272 + $0x50] sm:$0xf]
                  %295 = vst [vmem:[%s273 + $0x28] sm:$0xf] %v294
                  %v296 = vld [vmem:[%s272 + $0x58] sm:$0xf]
                  %297 = vst [vmem:[%s273 + $0x2c] sm:$0xf] %v296
                  %v298 = vld [vmem:[%s272 + $0x60] sm:$0xf]
                  %299 = vst [vmem:[%s273 + $0x30] sm:$0xf] %v298
                  %v300 = vld [vmem:[%s272 + $0x68] sm:$0xf]
                  %301 = vst [vmem:[%s273 + $0x34] sm:$0xf] %v300
                  %v302 = vld [vmem:[%s272 + $0x70] sm:$0xf]
                  %303 = vst [vmem:[%s273 + $0x38] sm:$0xf] %v302
                  %v304 = vld [vmem:[%s272 + $0x78] sm:$0xf]
                  %305 = vst [vmem:[%s273 + $0x3c] sm:$0xf] %v304
                $region63: #{gnn_forward.3} parent=50 // loop_footer
                  %s271 = sadd.s32 1, %s267
                $region64: #{gnn_forward.3} parent=50 // loop_footer_branch
                  %266 = sbr.rel target = $region60
                $region65: #{gnn_forward.3} parent=50 // loop_exit
                  _
              $region51: #{gnn_forward.3} parent=35 // pred_fallthru
                _
            $region36: #{gnn_forward.3} parent=31 // pred_fallthru
              _
            // Predicated region
            $region37: #{gnn_forward.3} parent=31 // pred_check
              _
            $region38: #{gnn_forward.3} parent=31 // pred_check_branch
              %213 = sbr.rel (0) target = $region40
            $region39: #{gnn_forward.3} parent=31 // pred_region
              loop: start=0, step=1, limit=1
              $region41: #{gnn_forward.3} parent=39 // loop_pre_header
                _
              $region42: #{gnn_forward.3} parent=39 // loop_header
                %s216 = sphi 0, %s220
                %p217 = scmp.ge.s32.totalorder %s216, 1
                %s221 = sphi %s207, %s207
                %s222 = sphi %s202, %s202
              $region43: #{gnn_forward.3} parent=39 // loop_header_branch
                %219 = sbr.rel (%p217) target = $region47
              $region44: #{gnn_forward.3} parent=39 // loop_body
                %v223 = vld [vmem:[%s221] sm:$0xf]
                %224 = vst [vmem:[%s222] sm:$0xf] %v223
                %v225 = vld [vmem:[%s221 + $0x8] sm:$0xf]
                %226 = vst [vmem:[%s222 + $0x4] sm:$0xf] %v225
                %v227 = vld [vmem:[%s221 + $0x10] sm:$0xf]
                %228 = vst [vmem:[%s222 + $0x8] sm:$0xf] %v227
                %v229 = vld [vmem:[%s221 + $0x18] sm:$0xf]
                %230 = vst [vmem:[%s222 + $0xc] sm:$0xf] %v229
                %v231 = vld [vmem:[%s221 + $0x20] sm:$0xf]
                %232 = vst [vmem:[%s222 + $0x10] sm:$0xf] %v231
                %v233 = vld [vmem:[%s221 + $0x28] sm:$0xf]
                %234 = vst [vmem:[%s222 + $0x14] sm:$0xf] %v233
                %v235 = vld [vmem:[%s221 + $0x30] sm:$0xf]
                %236 = vst [vmem:[%s222 + $0x18] sm:$0xf] %v235
                %v237 = vld [vmem:[%s221 + $0x38] sm:$0xf]
                %238 = vst [vmem:[%s222 + $0x1c] sm:$0xf] %v237
                %v239 = vld [vmem:[%s221 + $0x40] sm:$0xf]
                %240 = vst [vmem:[%s222 + $0x20] sm:$0xf] %v239
                %v241 = vld [vmem:[%s221 + $0x48] sm:$0xf]
                %242 = vst [vmem:[%s222 + $0x24] sm:$0xf] %v241
                %v243 = vld [vmem:[%s221 + $0x50] sm:$0xf]
                %244 = vst [vmem:[%s222 + $0x28] sm:$0xf] %v243
                %v245 = vld [vmem:[%s221 + $0x58] sm:$0xf]
                %246 = vst [vmem:[%s222 + $0x2c] sm:$0xf] %v245
                %v247 = vld [vmem:[%s221 + $0x60] sm:$0xf]
                %248 = vst [vmem:[%s222 + $0x30] sm:$0xf] %v247
                %v249 = vld [vmem:[%s221 + $0x68] sm:$0xf]
                %250 = vst [vmem:[%s222 + $0x34] sm:$0xf] %v249
                %v251 = vld [vmem:[%s221 + $0x70] sm:$0xf]
                %252 = vst [vmem:[%s222 + $0x38] sm:$0xf] %v251
                %v253 = vld [vmem:[%s221 + $0x78] sm:$0xf]
                %254 = vst [vmem:[%s222 + $0x3c] sm:$0xf] %v253
              $region45: #{gnn_forward.3} parent=39 // loop_footer
                %s220 = sadd.s32 1, %s216
              $region46: #{gnn_forward.3} parent=39 // loop_footer_branch
                %215 = sbr.rel target = $region42
              $region47: #{gnn_forward.3} parent=39 // loop_exit
                _
            $region40: #{gnn_forward.3} parent=31 // pred_fallthru
              _
          $region32: #{gnn_forward.3} parent=27 // pred_fallthru
            _
          %306 = vnop
        $region28: #{gnn_forward.3} parent=23 // pred_fallthru
          _
        // Predicated region
        $region66: #{gnn_forward.3} parent=23 // pred_check
          %p307 = pneg %p71
        $region67: #{gnn_forward.3} parent=23 // pred_check_branch
          %309 = sbr.rel (%p307) target = $region69
        $region68: #{gnn_forward.3} parent=23 // pred_region
          %s310 = smul.u32 16, %s19
          %p311 = scmp.lt.s32.totalorder %s310, 31
          %s312 = scalar_select %p311, %s310, 31
          %s313 = smul.addr %s312, 4
          %s314 = scalar_lea.vmem %s1, %s313
          %s315 = smul.u32 16, %s19
        $region69: #{gnn_forward.3} parent=23 // pred_fallthru
          _
        // Predicated region
        $region70: #{gnn_forward.3} parent=23 // pred_check
          %p316 = pneg %p97
        $region71: #{gnn_forward.3} parent=23 // pred_check_branch
          %318 = sbr.rel (%p316) target = $region73
        $region72: #{gnn_forward.3} parent=23 // pred_region
          %s319 = smul.u32 16, %s18
          %p320 = scmp.lt.s32.totalorder %s319, 31
          %s321 = scalar_select %p320, %s319, 31
          %s322 = smul.addr %s321, 4
          %s323 = scalar_lea.vmem %s2, %s322
          %s324 = smul.u32 16, %s18
        $region73: #{gnn_forward.3} parent=23 // pred_fallthru
          _
      $region24: #{gnn_forward.3} parent=5 // pred_fallthru
        _
      %p325 = scmp.le.s32.totalorder 1, %s11
      %p326 = scmp.lt.s32.totalorder %s11, 5
      %p327 = pnand %p325, %p326
      %p328 = pneg %p327
      // Predicated region
      $region74: #{gnn_forward.3} parent=5 // pred_check
        _
      $region75: #{gnn_forward.3} parent=5 // pred_check_branch
        %330 = sbr.rel (%p327) target = $region77
      $region76: #{gnn_forward.3} parent=5 // pred_region
        %s331 = ssub.s32 %s11, 1
        %s332 = sand.u32 %s38, 1
        %s333 = sand.u32 %s38, 1
        %s334 = smul.addr %s333, 64
        %s335 = scalar_lea.vmem [#allocation3], %s334
        // Predicated region
        $region78: #{gnn_forward.3} parent=76 // pred_check
          %p336 = pneg %p51
        $region79: #{gnn_forward.3} parent=76 // pred_check_branch
          %338 = sbr.rel (%p336) target = $region81
        $region80: #{gnn_forward.3} parent=76 // pred_region
          _
        $region81: #{gnn_forward.3} parent=76 // pred_fallthru
          _
        %s339 = sand.u32 %s38, 1
        %s340 = sand.u32 %s38, 1
        %s341 = smul.addr %s340, 64
        %s342 = scalar_lea.vmem [#allocation3], %s341
        %p343 = pneg %p51
        %p344 = pneg %p48
        %s345 = smul.u32 16, %s21
        %p346 = scmp.lt.s32.totalorder %s345, 31
        %s347 = scalar_select %p346, %s345, 31
        %s348 = smul.addr %s347, 4
        %s349 = scalar_lea.vmem %s1, %s348
        %p350 = pneg %p77
        %p351 = pneg %p74
        %s352 = smul.u32 16, %s20
        %p353 = scmp.lt.s32.totalorder %s352, 31
        %s354 = scalar_select %p353, %s352, 31
        %s355 = smul.addr %s354, 4
        %s356 = scalar_lea.vmem %s2, %s355
        %p357 = pneg %p103
        %p358 = pneg %p100
        %p359 = pneg %p124
        %p360 = pneg %p121
        %p361 = pneg %p145
        %p362 = pneg %p142
        %p363 = pneg %p171
        %p364 = pneg %p168
        %s365 = smul.u32 16, %s20
        %p366 = scmp.lt.s32.totalorder %s365, 31
        %s367 = scalar_select %p366, %s365, 31
        %s368 = smul.addr %s367, 8
        %s369 = scalar_lea.vmem %s5, %s368
        %s370 = smul.u32 16, %s20
        %s371 = smul.u32 16, %s21
        %p372 = scmp.lt.s32.totalorder %s371, 31
        %s373 = scalar_select %p372, %s371, 31
        %s374 = smul.addr %s373, 4
        %s375 = scalar_lea.vmem %s1, %s374
        %s376 = smul.u32 16, %s21
        %s377 = smul.u32 16, %s20
        %p378 = scmp.lt.s32.totalorder %s377, 31
        %s379 = scalar_select %p378, %s377, 31
        %s380 = smul.addr %s379, 4
        %s381 = scalar_lea.vmem %s2, %s380
        %s382 = smul.u32 16, %s20
        %s383 = smul.u32 16, %s20
        %p384 = scmp.lt.s32.totalorder %s383, 31
        %s385 = scalar_select %p384, %s383, 31
        %s386 = smul.addr %s385, 8
        %s387 = scalar_lea.vmem %s5, %s386
        %s388 = smul.u32 16, %s20
        %p390 = scmp.eq.s32.totalorder %s21, 0
        // Predicated region
        $region82: #{gnn_forward.3} parent=76 // pred_check
          %p391 = pneg %p390
        $region83: #{gnn_forward.3} parent=76 // pred_check_branch
          %393 = sbr.rel (%p391) target = $region85
        $region84: #{gnn_forward.3} parent=76 // pred_region
          %394 = vst [vmem:[#allocation2] sm:$0xff] 0.0
          %395 = vst [vmem:[#allocation2 + $0x8] sm:$0xff] 0.0
          %396 = vst [vmem:[#allocation2 + $0x10] sm:$0xff] 0.0
          %397 = vst [vmem:[#allocation2 + $0x18] sm:$0xff] 0.0
          %398 = vst [vmem:[#allocation2 + $0x20] sm:$0xff] 0.0
          %399 = vst [vmem:[#allocation2 + $0x28] sm:$0xff] 0.0
          %400 = vst [vmem:[#allocation2 + $0x30] sm:$0xff] 0.0
          %401 = vst [vmem:[#allocation2 + $0x38] sm:$0xff] 0.0
          %402 = vst [vmem:[#allocation2 + $0x40] sm:$0xff] 0.0
          %403 = vst [vmem:[#allocation2 + $0x48] sm:$0xff] 0.0
          %404 = vst [vmem:[#allocation2 + $0x50] sm:$0xff] 0.0
          %405 = vst [vmem:[#allocation2 + $0x58] sm:$0xff] 0.0
          %406 = vst [vmem:[#allocation2 + $0x60] sm:$0xff] 0.0
          %407 = vst [vmem:[#allocation2 + $0x68] sm:$0xff] 0.0
          %408 = vst [vmem:[#allocation2 + $0x70] sm:$0xff] 0.0
          %409 = vst [vmem:[#allocation2 + $0x78] sm:$0xff] 0.0
        $region85: #{gnn_forward.3} parent=76 // pred_fallthru
          _
        %v410 = vld [vmem:[#allocation2] sm:$0xff]
        %v411 = vld [vmem:[#allocation2 + $0x8] sm:$0xff]
        %v412 = vld [vmem:[#allocation2 + $0x10] sm:$0xff]
        %v413 = vld [vmem:[#allocation2 + $0x18] sm:$0xff]
        %v414 = vld [vmem:[#allocation2 + $0x20] sm:$0xff]
        %v415 = vld [vmem:[#allocation2 + $0x28] sm:$0xff]
        %v416 = vld [vmem:[#allocation2 + $0x30] sm:$0xff]
        %v417 = vld [vmem:[#allocation2 + $0x38] sm:$0xff]
        %v418 = vld [vmem:[#allocation2 + $0x40] sm:$0xff]
        %v419 = vld [vmem:[#allocation2 + $0x48] sm:$0xff]
        %v420 = vld [vmem:[#allocation2 + $0x50] sm:$0xff]
        %v421 = vld [vmem:[#allocation2 + $0x58] sm:$0xff]
        %v422 = vld [vmem:[#allocation2 + $0x60] sm:$0xff]
        %v423 = vld [vmem:[#allocation2 + $0x68] sm:$0xff]
        %v424 = vld [vmem:[#allocation2 + $0x70] sm:$0xff]
        %v425 = vld [vmem:[#allocation2 + $0x78] sm:$0xff]
        %v426 = vld [vmem:[%s335] sm:$0xf]
        %v427 = vld [vmem:[%s335 + $0x4] sm:$0xf]
        %v428 = vld [vmem:[%s335 + $0x8] sm:$0xf]
        %v429 = vld [vmem:[%s335 + $0xc] sm:$0xf]
        %v430 = vld [vmem:[%s335 + $0x10] sm:$0xf]
        %v431 = vld [vmem:[%s335 + $0x14] sm:$0xf]
        %v432 = vld [vmem:[%s335 + $0x18] sm:$0xf]
        %v433 = vld [vmem:[%s335 + $0x1c] sm:$0xf]
        %v434 = vld [vmem:[%s335 + $0x20] sm:$0xf]
        %v435 = vld [vmem:[%s335 + $0x24] sm:$0xf]
        %v436 = vld [vmem:[%s335 + $0x28] sm:$0xf]
        %v437 = vld [vmem:[%s335 + $0x2c] sm:$0xf]
        %v438 = vld [vmem:[%s335 + $0x30] sm:$0xf]
        %v439 = vld [vmem:[%s335 + $0x34] sm:$0xf]
        %v440 = vld [vmem:[%s335 + $0x38] sm:$0xf]
        %v441 = vld [vmem:[%s335 + $0x3c] sm:$0xf]
        %v442 = vld [vmem:[%s375] sm:$0xf]
        %v443 = vld [vmem:[%s375 + $0x4] sm:$0xf]
        %v444 = vld [vmem:[%s375 + $0x8] sm:$0xf]
        %v445 = vld [vmem:[%s375 + $0xc] sm:$0xf]
        %v446 = vld [vmem:[%s375 + $0x10] sm:$0xf]
        %v447 = vld [vmem:[%s375 + $0x14] sm:$0xf]
        %v448 = vld [vmem:[%s375 + $0x18] sm:$0xf]
        %v449 = vld [vmem:[%s375 + $0x1c] sm:$0xf]
        %v450 = vld [vmem:[%s375 + $0x20] sm:$0xf]
        %v451 = vld [vmem:[%s375 + $0x24] sm:$0xf]
        %v452 = vld [vmem:[%s375 + $0x28] sm:$0xf]
        %v453 = vld [vmem:[%s375 + $0x2c] sm:$0xf]
        %v454 = vld [vmem:[%s375 + $0x30] sm:$0xf]
        %v455 = vld [vmem:[%s375 + $0x34] sm:$0xf]
        %v456 = vld [vmem:[%s375 + $0x38] sm:$0xf]
        %v457 = vld [vmem:[%s375 + $0x3c] sm:$0xf]
        %v474 = vunpack.c.l.b16 %v426
        %v475 = vunpack.c.l.b16 %v427
        %v476 = vunpack.c.l.b16 %v428
        %v477 = vunpack.c.l.b16 %v429
        %v478 = vunpack.c.l.b16 %v430
        %v479 = vunpack.c.l.b16 %v431
        %v480 = vunpack.c.l.b16 %v432
        %v481 = vunpack.c.l.b16 %v433
        %v482 = vunpack.c.l.b16 %v434
        %v483 = vunpack.c.l.b16 %v435
        %v484 = vunpack.c.l.b16 %v436
        %v485 = vunpack.c.l.b16 %v437
        %v486 = vunpack.c.l.b16 %v438
        %v487 = vunpack.c.l.b16 %v439
        %v488 = vunpack.c.l.b16 %v440
        %v489 = vunpack.c.l.b16 %v441
        %v490 = vpack.c.b16 %v475, %v474
        %v491 = vpack.c.b16 %v477, %v476
        %v492 = vpack.c.b16 %v479, %v478
        %v493 = vpack.c.b16 %v481, %v480
        %v494 = vpack.c.b16 %v483, %v482
        %v495 = vpack.c.b16 %v485, %v484
        %v496 = vpack.c.b16 %v487, %v486
        %v497 = vpack.c.b16 %v489, %v488
        %v522 = vunpack.c.l.b16 %v442
        %v523 = vunpack.c.l.b16 %v443
        %v524 = vunpack.c.l.b16 %v444
        %v525 = vunpack.c.l.b16 %v445
        %v526 = vunpack.c.l.b16 %v446
        %v527 = vunpack.c.l.b16 %v447
        %v528 = vunpack.c.l.b16 %v448
        %v529 = vunpack.c.l.b16 %v449
        %v530 = vunpack.c.l.b16 %v450
        %v531 = vunpack.c.l.b16 %v451
        %v532 = vunpack.c.l.b16 %v452
        %v533 = vunpack.c.l.b16 %v453
        %v534 = vunpack.c.l.b16 %v454
        %v535 = vunpack.c.l.b16 %v455
        %v536 = vunpack.c.l.b16 %v456
        %v537 = vunpack.c.l.b16 %v457
        %v538 = vpack.c.b16 %v523, %v522
        %v539 = vpack.c.b16 %v525, %v524
        %v540 = vpack.c.b16 %v527, %v526
        %v541 = vpack.c.b16 %v529, %v528
        %v542 = vpack.c.b16 %v531, %v530
        %v543 = vpack.c.b16 %v533, %v532
        %v544 = vpack.c.b16 %v535, %v534
        %v545 = vpack.c.b16 %v537, %v536
        %554 = vmatprep.subr.bf16.mxu0 0
        %555 = vmatpush1.bf16.msra.mxu0 %v538
        %556 = vmatprep.subr.bf16.mxu0 0
        %557 = vmatpush1.bf16.msra.mxu0 %v539
        %558 = vmatprep.subr.bf16.mxu0 0
        %559 = vmatpush1.bf16.msra.mxu0 %v540
        %560 = vmatprep.subr.bf16.mxu0 0
        %561 = vmatpush1.bf16.msra.mxu0 %v541
        %562 = vmatprep.subr.bf16.mxu0 0
        %563 = vmatpush1.bf16.msra.mxu0 %v542
        %564 = vmatprep.subr.bf16.mxu0 0
        %565 = vmatpush1.bf16.msra.mxu0 %v543
        %566 = vmatprep.subr.bf16.mxu0 0
        %567 = vmatpush1.bf16.msra.mxu0 %v544
        %568 = vmatprep.subr.bf16.mxu0 0
        %569 = vmatpush1.bf16.msra.mxu0 %v545
        %570 = vmatprep.subr.bf16.mxu0 0
        %571 = vmatpush1.bf16.msra.mxu0 0
        %572 = vmatprep.subr.bf16.mxu0 0
        %573 = vmatpush1.bf16.msra.mxu0 0
        %574 = vmatprep.subr.bf16.mxu0 0
        %575 = vmatpush1.bf16.msra.mxu0 0
        %576 = vmatprep.subr.bf16.mxu0 0
        %577 = vmatpush1.bf16.msra.mxu0 0
        %578 = vmatprep.subr.bf16.mxu0 0
        %579 = vmatpush1.bf16.msra.mxu0 0
        %580 = vmatprep.subr.bf16.mxu0 0
        %581 = vmatpush1.bf16.msra.mxu0 0
        %582 = vmatprep.subr.bf16.mxu0 0
        %583 = vmatpush1.bf16.msra.mxu0 0
        %584 = vmatprep.subr.bf16.mxu0 0
        %585 = vmatpush1.bf16.msra.mxu0 0
        %586 = vmatprep.mubr.bf16.mxu0 0
        %587 = vmatmul.mubr.bf16.gmra.mrb[0].mxu0 %v490
        %v588 = vpop.f32.mrb[0].mxu0
        %v589 = vadd.f32 0.0, %v588
        %v590 = vpop.f32.mrb[0].mxu0
        %v591 = vpop.f32.mrb[0].mxu0
        %v592 = vadd.f32 0.0, %v591
        %v593 = vpop.f32.mrb[0].mxu0
        %594 = vmatprep.mubr.bf16.mxu0 0
        %595 = vmatmul.mubr.bf16.gmra.mrb[0].mxu0 %v491
        %v596 = vpop.f32.mrb[0].mxu0
        %v597 = vadd.f32 0.0, %v596
        %v598 = vpop.f32.mrb[0].mxu0
        %v599 = vpop.f32.mrb[0].mxu0
        %v600 = vadd.f32 0.0, %v599
        %v601 = vpop.f32.mrb[0].mxu0
        %602 = vmatprep.mubr.bf16.mxu0 0
        %603 = vmatmul.mubr.bf16.gmra.mrb[0].mxu0 %v492
        %v604 = vpop.f32.mrb[0].mxu0
        %v605 = vadd.f32 0.0, %v604
        %v606 = vpop.f32.mrb[0].mxu0
        %v607 = vpop.f32.mrb[0].mxu0
        %v608 = vadd.f32 0.0, %v607
        %v609 = vpop.f32.mrb[0].mxu0
        %610 = vmatprep.mubr.bf16.mxu0 0
        %611 = vmatmul.mubr.bf16.gmra.mrb[0].mxu0 %v493
        %v612 = vpop.f32.mrb[0].mxu0
        %v613 = vadd.f32 0.0, %v612
        %v614 = vpop.f32.mrb[0].mxu0
        %v615 = vpop.f32.mrb[0].mxu0
        %v616 = vadd.f32 0.0, %v615
        %v617 = vpop.f32.mrb[0].mxu0
        %618 = vmatprep.mubr.bf16.mxu0 0
        %619 = vmatmul.mubr.bf16.gmra.mrb[0].mxu0 %v494
        %v620 = vpop.f32.mrb[0].mxu0
        %v621 = vadd.f32 0.0, %v620
        %v622 = vpop.f32.mrb[0].mxu0
        %v623 = vpop.f32.mrb[0].mxu0
        %v624 = vadd.f32 0.0, %v623
        %v625 = vpop.f32.mrb[0].mxu0
        %626 = vmatprep.mubr.bf16.mxu0 0
        %627 = vmatmul.mubr.bf16.gmra.mrb[0].mxu0 %v495
        %v628 = vpop.f32.mrb[0].mxu0
        %v629 = vadd.f32 0.0, %v628
        %v630 = vpop.f32.mrb[0].mxu0
        %v631 = vpop.f32.mrb[0].mxu0
        %v632 = vadd.f32 0.0, %v631
        %v633 = vpop.f32.mrb[0].mxu0
        %634 = vmatprep.mubr.bf16.mxu0 0
        %635 = vmatmul.mubr.bf16.gmra.mrb[0].mxu0 %v496
        %v636 = vpop.f32.mrb[0].mxu0
        %v637 = vadd.f32 0.0, %v636
        %v638 = vpop.f32.mrb[0].mxu0
        %v639 = vpop.f32.mrb[0].mxu0
        %v640 = vadd.f32 0.0, %v639
        %v641 = vpop.f32.mrb[0].mxu0
        %642 = vmatprep.mubr.bf16.mxu0 0
        %643 = vmatmul.mubr.bf16.gmra.mrb[0].mxu0 %v497
        %v644 = vpop.f32.mrb[0].mxu0
        %v645 = vadd.f32 0.0, %v644
        %v646 = vpop.f32.mrb[0].mxu0
        %v647 = vpop.f32.mrb[0].mxu0
        %v648 = vadd.f32 0.0, %v647
        %v649 = vpop.f32.mrb[0].mxu0
        %650 = vdwg.mxu0
        %v651 = vadd.f32 %v410, %v589
        %v652 = vadd.f32 %v411, %v592
        %v653 = vadd.f32 %v412, %v597
        %v654 = vadd.f32 %v413, %v600
        %v655 = vadd.f32 %v414, %v605
        %v656 = vadd.f32 %v415, %v608
        %v657 = vadd.f32 %v416, %v613
        %v658 = vadd.f32 %v417, %v616
        %v659 = vadd.f32 %v418, %v621
        %v660 = vadd.f32 %v419, %v624
        %v661 = vadd.f32 %v420, %v629
        %v662 = vadd.f32 %v421, %v632
        %v663 = vadd.f32 %v422, %v637
        %v664 = vadd.f32 %v423, %v640
        %v665 = vadd.f32 %v424, %v645
        %v666 = vadd.f32 %v425, %v648
        %667 = vst [vmem:[#allocation2] sm:$0xff] %v651
        %668 = vst [vmem:[#allocation2 + $0x8] sm:$0xff] %v652
        %669 = vst [vmem:[#allocation2 + $0x10] sm:$0xff] %v653
        %670 = vst [vmem:[#allocation2 + $0x18] sm:$0xff] %v654
        %671 = vst [vmem:[#allocation2 + $0x20] sm:$0xff] %v655
        %672 = vst [vmem:[#allocation2 + $0x28] sm:$0xff] %v656
        %673 = vst [vmem:[#allocation2 + $0x30] sm:$0xff] %v657
        %674 = vst [vmem:[#allocation2 + $0x38] sm:$0xff] %v658
        %675 = vst [vmem:[#allocation2 + $0x40] sm:$0xff] %v659
        %676 = vst [vmem:[#allocation2 + $0x48] sm:$0xff] %v660
        %677 = vst [vmem:[#allocation2 + $0x50] sm:$0xff] %v661
        %678 = vst [vmem:[#allocation2 + $0x58] sm:$0xff] %v662
        %679 = vst [vmem:[#allocation2 + $0x60] sm:$0xff] %v663
        %680 = vst [vmem:[#allocation2 + $0x68] sm:$0xff] %v664
        %681 = vst [vmem:[#allocation2 + $0x70] sm:$0xff] %v665
        %682 = vst [vmem:[#allocation2 + $0x78] sm:$0xff] %v666
        %p683 = scmp.eq.s32.totalorder %s21, 1
        // Predicated region
        $region86: #{gnn_forward.3} parent=76 // pred_check
          %p684 = pneg %p683
        $region87: #{gnn_forward.3} parent=76 // pred_check_branch
          %686 = sbr.rel (%p684) target = $region89
        $region88: #{gnn_forward.3} parent=76 // pred_region
          %v687 = vld [vmem:[#allocation2] sm:$0xff]
          %v688 = vld [vmem:[#allocation2 + $0x8] sm:$0xff]
          %v689 = vld [vmem:[#allocation2 + $0x10] sm:$0xff]
          %v690 = vld [vmem:[#allocation2 + $0x18] sm:$0xff]
          %v691 = vld [vmem:[#allocation2 + $0x20] sm:$0xff]
          %v692 = vld [vmem:[#allocation2 + $0x28] sm:$0xff]
          %v693 = vld [vmem:[#allocation2 + $0x30] sm:$0xff]
          %v694 = vld [vmem:[#allocation2 + $0x38] sm:$0xff]
          %v695 = vld [vmem:[#allocation2 + $0x40] sm:$0xff]
          %v696 = vld [vmem:[#allocation2 + $0x48] sm:$0xff]
          %v697 = vld [vmem:[#allocation2 + $0x50] sm:$0xff]
          %v698 = vld [vmem:[#allocation2 + $0x58] sm:$0xff]
          %v699 = vld [vmem:[#allocation2 + $0x60] sm:$0xff]
          %v700 = vld [vmem:[#allocation2 + $0x68] sm:$0xff]
          %v701 = vld [vmem:[#allocation2 + $0x70] sm:$0xff]
          %v702 = vld [vmem:[#allocation2 + $0x78] sm:$0xff]
          %v703 = vpack.c.bf16 %v688, %v687
          %v704 = vpack.c.bf16 %v690, %v689
          %v705 = vpack.c.bf16 %v692, %v691
          %v706 = vpack.c.bf16 %v694, %v693
          %v707 = vpack.c.bf16 %v696, %v695
          %v708 = vpack.c.bf16 %v698, %v697
          %v709 = vpack.c.bf16 %v700, %v699
          %v710 = vpack.c.bf16 %v702, %v701
          %v711 = vld [vmem:[%s381] sm:$0xf]
          %v712 = vld [vmem:[%s381 + $0x4] sm:$0xf]
          %v713 = vld [vmem:[%s381 + $0x8] sm:$0xf]
          %v714 = vld [vmem:[%s381 + $0xc] sm:$0xf]
          %v715 = vld [vmem:[%s381 + $0x10] sm:$0xf]
          %v716 = vld [vmem:[%s381 + $0x14] sm:$0xf]
          %v717 = vld [vmem:[%s381 + $0x18] sm:$0xf]
          %v718 = vld [vmem:[%s381 + $0x1c] sm:$0xf]
          %v719 = vld [vmem:[%s381 + $0x20] sm:$0xf]
          %v720 = vld [vmem:[%s381 + $0x24] sm:$0xf]
          %v721 = vld [vmem:[%s381 + $0x28] sm:$0xf]
          %v722 = vld [vmem:[%s381 + $0x2c] sm:$0xf]
          %v723 = vld [vmem:[%s381 + $0x30] sm:$0xf]
          %v724 = vld [vmem:[%s381 + $0x34] sm:$0xf]
          %v725 = vld [vmem:[%s381 + $0x38] sm:$0xf]
          %v726 = vld [vmem:[%s381 + $0x3c] sm:$0xf]
          %v743 = vunpack.c.l.b16 %v711
          %v744 = vunpack.c.l.b16 %v712
          %v745 = vunpack.c.l.b16 %v713
          %v746 = vunpack.c.l.b16 %v714
          %v747 = vunpack.c.l.b16 %v715
          %v748 = vunpack.c.l.b16 %v716
          %v749 = vunpack.c.l.b16 %v717
          %v750 = vunpack.c.l.b16 %v718
          %v751 = vunpack.c.l.b16 %v719
          %v752 = vunpack.c.l.b16 %v720
          %v753 = vunpack.c.l.b16 %v721
          %v754 = vunpack.c.l.b16 %v722
          %v755 = vunpack.c.l.b16 %v723
          %v756 = vunpack.c.l.b16 %v724
          %v757 = vunpack.c.l.b16 %v725
          %v758 = vunpack.c.l.b16 %v726
          %v759 = vpack.c.b16 %v744, %v743
          %v760 = vpack.c.b16 %v746, %v745
          %v761 = vpack.c.b16 %v748, %v747
          %v762 = vpack.c.b16 %v750, %v749
          %v763 = vpack.c.b16 %v752, %v751
          %v764 = vpack.c.b16 %v754, %v753
          %v765 = vpack.c.b16 %v756, %v755
          %v766 = vpack.c.b16 %v758, %v757
          %v775 = vld [vmem:[%s3] sm:$0xf]
          %v776 = vld [vmem:[%s3 + $0x4] sm:$0xf]
          %v777 = vld [vmem:[%s3 + $0x8] sm:$0xf]
          %v778 = vld [vmem:[%s3 + $0xc] sm:$0xf]
          %v779 = vld [vmem:[%s3 + $0x10] sm:$0xf]
          %v780 = vld [vmem:[%s3 + $0x14] sm:$0xf]
          %v781 = vld [vmem:[%s3 + $0x18] sm:$0xf]
          %v782 = vld [vmem:[%s3 + $0x1c] sm:$0xf]
          %v783 = vld [vmem:[%s3 + $0x20] sm:$0xf]
          %v784 = vld [vmem:[%s3 + $0x24] sm:$0xf]
          %v785 = vld [vmem:[%s3 + $0x28] sm:$0xf]
          %v786 = vld [vmem:[%s3 + $0x2c] sm:$0xf]
          %v787 = vld [vmem:[%s3 + $0x30] sm:$0xf]
          %v788 = vld [vmem:[%s3 + $0x34] sm:$0xf]
          %v789 = vld [vmem:[%s3 + $0x38] sm:$0xf]
          %v790 = vld [vmem:[%s3 + $0x3c] sm:$0xf]
          %v791 = vld [vmem:[%s3 + $0x40] sm:$0xf]
          %v792 = vld [vmem:[%s3 + $0x44] sm:$0xf]
          %v793 = vld [vmem:[%s3 + $0x48] sm:$0xf]
          %v794 = vld [vmem:[%s3 + $0x4c] sm:$0xf]
          %v795 = vld [vmem:[%s3 + $0x50] sm:$0xf]
          %v796 = vld [vmem:[%s3 + $0x54] sm:$0xf]
          %v797 = vld [vmem:[%s3 + $0x58] sm:$0xf]
          %v798 = vld [vmem:[%s3 + $0x5c] sm:$0xf]
          %v799 = vld [vmem:[%s3 + $0x60] sm:$0xf]
          %v800 = vld [vmem:[%s3 + $0x64] sm:$0xf]
          %v801 = vld [vmem:[%s3 + $0x68] sm:$0xf]
          %v802 = vld [vmem:[%s3 + $0x6c] sm:$0xf]
          %v803 = vld [vmem:[%s3 + $0x70] sm:$0xf]
          %v804 = vld [vmem:[%s3 + $0x74] sm:$0xf]
          %v805 = vld [vmem:[%s3 + $0x78] sm:$0xf]
          %v806 = vld [vmem:[%s3 + $0x7c] sm:$0xf]
          %v807 = vld [vmem:[%s4] sm:$0x1]
          %v809 = vlaneseq
          %v810 = vshrl.u32 %v809, 7
          %v811 = vsub.s32 0, %v810
          %v812 = vrot.slane %v807, %v811
          %v846 = vunpack.c.l.b16 %v775
          %v847 = vunpack.c.l.b16 %v776
          %v848 = vunpack.c.l.b16 %v777
          %v849 = vunpack.c.l.b16 %v778
          %v850 = vunpack.c.l.b16 %v779
          %v851 = vunpack.c.l.b16 %v780
          %v852 = vunpack.c.l.b16 %v781
          %v853 = vunpack.c.l.b16 %v782
          %v854 = vunpack.c.l.b16 %v783
          %v855 = vunpack.c.l.b16 %v784
          %v856 = vunpack.c.l.b16 %v785
          %v857 = vunpack.c.l.b16 %v786
          %v858 = vunpack.c.l.b16 %v787
          %v859 = vunpack.c.l.b16 %v788
          %v860 = vunpack.c.l.b16 %v789
          %v861 = vunpack.c.l.b16 %v790
          %v862 = vunpack.c.l.b16 %v791
          %v863 = vunpack.c.l.b16 %v792
          %v864 = vunpack.c.l.b16 %v793
          %v865 = vunpack.c.l.b16 %v794
          %v866 = vunpack.c.l.b16 %v795
          %v867 = vunpack.c.l.b16 %v796
          %v868 = vunpack.c.l.b16 %v797
          %v869 = vunpack.c.l.b16 %v798
          %v870 = vunpack.c.l.b16 %v799
          %v871 = vunpack.c.l.b16 %v800
          %v872 = vunpack.c.l.b16 %v801
          %v873 = vunpack.c.l.b16 %v802
          %v874 = vunpack.c.l.b16 %v803
          %v875 = vunpack.c.l.b16 %v804
          %v876 = vunpack.c.l.b16 %v805
          %v877 = vunpack.c.l.b16 %v806
          %v878 = vpack.c.b16 %v847, %v846
          %v879 = vpack.c.b16 %v849, %v848
          %v880 = vpack.c.b16 %v851, %v850
          %v881 = vpack.c.b16 %v853, %v852
          %v882 = vpack.c.b16 %v855, %v854
          %v883 = vpack.c.b16 %v857, %v856
          %v884 = vpack.c.b16 %v859, %v858
          %v885 = vpack.c.b16 %v861, %v860
          %v886 = vpack.c.b16 %v863, %v862
          %v887 = vpack.c.b16 %v865, %v864
          %v888 = vpack.c.b16 %v867, %v866
          %v889 = vpack.c.b16 %v869, %v868
          %v890 = vpack.c.b16 %v871, %v870
          %v891 = vpack.c.b16 %v873, %v872
          %v892 = vpack.c.b16 %v875, %v874
          %v893 = vpack.c.b16 %v877, %v876
          %910 = vmatprep.subr.bf16.mxu0 0
          %911 = vmatpush1.bf16.msra.mxu0 %v878
          %912 = vmatprep.subr.bf16.mxu0 0
          %913 = vmatpush1.bf16.msra.mxu0 %v879
          %914 = vmatprep.subr.bf16.mxu0 0
          %915 = vmatpush1.bf16.msra.mxu0 %v880
          %916 = vmatprep.subr.bf16.mxu0 0
          %917 = vmatpush1.bf16.msra.mxu0 %v881
          %918 = vmatprep.subr.bf16.mxu0 0
          %919 = vmatpush1.bf16.msra.mxu0 %v882
          %920 = vmatprep.subr.bf16.mxu0 0
          %921 = vmatpush1.bf16.msra.mxu0 %v883
          %922 = vmatprep.subr.bf16.mxu0 0
          %923 = vmatpush1.bf16.msra.mxu0 %v884
          %924 = vmatprep.subr.bf16.mxu0 0
          %925 = vmatpush1.bf16.msra.mxu0 %v885
          %926 = vmatprep.subr.bf16.mxu0 0
          %927 = vmatpush1.bf16.msra.mxu0 %v886
          %928 = vmatprep.subr.bf16.mxu0 0
          %929 = vmatpush1.bf16.msra.mxu0 %v887
          %930 = vmatprep.subr.bf16.mxu0 0
          %931 = vmatpush1.bf16.msra.mxu0 %v888
          %932 = vmatprep.subr.bf16.mxu0 0
          %933 = vmatpush1.bf16.msra.mxu0 %v889
          %934 = vmatprep.subr.bf16.mxu0 0
          %935 = vmatpush1.bf16.msra.mxu0 %v890
          %936 = vmatprep.subr.bf16.mxu0 0
          %937 = vmatpush1.bf16.msra.mxu0 %v891
          %938 = vmatprep.subr.bf16.mxu0 0
          %939 = vmatpush1.bf16.msra.mxu0 %v892
          %940 = vmatprep.subr.bf16.mxu0 0
          %941 = vmatpush1.bf16.msra.mxu0 %v893
          %942 = vmatprep.mubr.bf16.mxu0 %v759
          %943 = vmatmul.mubr.bf16.gmra.mrb[0].mxu0 %v703
          %v944 = vpop.f32.mrb[0].mxu0
          %v945 = vadd.f32 %v812, %v944
          %v946 = vpop.f32.mrb[0].mxu0
          %v947 = vpop.f32.mrb[0].mxu0
          %v948 = vadd.f32 %v812, %v947
          %v949 = vpop.f32.mrb[0].mxu0
          %950 = vmatprep.mubr.bf16.mxu0 %v760
          %951 = vmatmul.mubr.bf16.gmra.mrb[0].mxu0 %v704
          %v952 = vpop.f32.mrb[0].mxu0
          %v953 = vadd.f32 %v812, %v952
          %v954 = vpop.f32.mrb[0].mxu0
          %v955 = vpop.f32.mrb[0].mxu0
          %v956 = vadd.f32 %v812, %v955
          %v957 = vpop.f32.mrb[0].mxu0
          %958 = vmatprep.mubr.bf16.mxu0 %v761
          %959 = vmatmul.mubr.bf16.gmra.mrb[0].mxu0 %v705
          %v960 = vpop.f32.mrb[0].mxu0
          %v961 = vadd.f32 %v812, %v960
          %v962 = vpop.f32.mrb[0].mxu0
          %v963 = vpop.f32.mrb[0].mxu0
          %v964 = vadd.f32 %v812, %v963
          %v965 = vpop.f32.mrb[0].mxu0
          %966 = vmatprep.mubr.bf16.mxu0 %v762
          %967 = vmatmul.mubr.bf16.gmra.mrb[0].mxu0 %v706
          %v968 = vpop.f32.mrb[0].mxu0
          %v969 = vadd.f32 %v812, %v968
          %v970 = vpop.f32.mrb[0].mxu0
          %v971 = vpop.f32.mrb[0].mxu0
          %v972 = vadd.f32 %v812, %v971
          %v973 = vpop.f32.mrb[0].mxu0
          %974 = vmatprep.mubr.bf16.mxu0 %v763
          %975 = vmatmul.mubr.bf16.gmra.mrb[0].mxu0 %v707
          %v976 = vpop.f32.mrb[0].mxu0
          %v977 = vadd.f32 %v812, %v976
          %v978 = vpop.f32.mrb[0].mxu0
          %v979 = vpop.f32.mrb[0].mxu0
          %v980 = vadd.f32 %v812, %v979
          %v981 = vpop.f32.mrb[0].mxu0
          %982 = vmatprep.mubr.bf16.mxu0 %v764
          %983 = vmatmul.mubr.bf16.gmra.mrb[0].mxu0 %v708
          %v984 = vpop.f32.mrb[0].mxu0
          %v985 = vadd.f32 %v812, %v984
          %v986 = vpop.f32.mrb[0].mxu0
          %v987 = vpop.f32.mrb[0].mxu0
          %v988 = vadd.f32 %v812, %v987
          %v989 = vpop.f32.mrb[0].mxu0
          %990 = vmatprep.mubr.bf16.mxu0 %v765
          %991 = vmatmul.mubr.bf16.gmra.mrb[0].mxu0 %v709
          %v992 = vpop.f32.mrb[0].mxu0
          %v993 = vadd.f32 %v812, %v992
          %v994 = vpop.f32.mrb[0].mxu0
          %v995 = vpop.f32.mrb[0].mxu0
          %v996 = vadd.f32 %v812, %v995
          %v997 = vpop.f32.mrb[0].mxu0
          %998 = vmatprep.mubr.bf16.mxu0 %v766
          %999 = vmatmul.mubr.bf16.gmra.mrb[0].mxu0 %v710
          %v1000 = vpop.f32.mrb[0].mxu0
          %v1001 = vadd.f32 %v812, %v1000
          %v1002 = vpop.f32.mrb[0].mxu0
          %v1003 = vpop.f32.mrb[0].mxu0
          %v1004 = vadd.f32 %v812, %v1003
          %v1005 = vpop.f32.mrb[0].mxu0
          %1006 = vdwg.mxu0
          %1007 = vst [vmem:[%s387] sm:$0xff] %v945
          %1008 = vst [vmem:[%s387 + $0x8] sm:$0xff] %v948
          %1009 = vst [vmem:[%s387 + $0x10] sm:$0xff] %v953
          %1010 = vst [vmem:[%s387 + $0x18] sm:$0xff] %v956
          %1011 = vst [vmem:[%s387 + $0x20] sm:$0xff] %v961
          %1012 = vst [vmem:[%s387 + $0x28] sm:$0xff] %v964
          %1013 = vst [vmem:[%s387 + $0x30] sm:$0xff] %v969
          %1014 = vst [vmem:[%s387 + $0x38] sm:$0xff] %v972
          %1015 = vst [vmem:[%s387 + $0x40] sm:$0xff] %v977
          %1016 = vst [vmem:[%s387 + $0x48] sm:$0xff] %v980
          %1017 = vst [vmem:[%s387 + $0x50] sm:$0xff] %v985
          %1018 = vst [vmem:[%s387 + $0x58] sm:$0xff] %v988
          %1019 = vst [vmem:[%s387 + $0x60] sm:$0xff] %v993
          %1020 = vst [vmem:[%s387 + $0x68] sm:$0xff] %v996
          %1021 = vst [vmem:[%s387 + $0x70] sm:$0xff] %v1001
          %1022 = vst [vmem:[%s387 + $0x78] sm:$0xff] %v1004
        $region89: #{gnn_forward.3} parent=76 // pred_fallthru
          _
        %s1023 = smul.u32 16, %s20
        %p1024 = scmp.lt.s32.totalorder %s1023, 31
        %s1025 = scalar_select %p1024, %s1023, 31
        %s1026 = smul.addr %s1025, 8
        %s1027 = scalar_lea.vmem %s5, %s1026
        // Predicated region
        $region90: #{gnn_forward.3} parent=76 // pred_check
          %p1028 = pneg %p168
        $region91: #{gnn_forward.3} parent=76 // pred_check_branch
          %1030 = sbr.rel (%p1028) target = $region93
        $region92: #{gnn_forward.3} parent=76 // pred_region
          %s1031 = smul.u32 16, %s20
        $region93: #{gnn_forward.3} parent=76 // pred_fallthru
          _
      $region77: #{gnn_forward.3} parent=5 // pred_fallthru
        _
      %p1032 = scmp.le.s32.totalorder 2, %s11
      // Predicated region
      $region94: #{gnn_forward.3} parent=5 // pred_check
        %p1033 = pneg %p1032
      $region95: #{gnn_forward.3} parent=5 // pred_check_branch
        %1035 = sbr.rel (%p1033) target = $region97
      $region96: #{gnn_forward.3} parent=5 // pred_region
        %s1036 = ssub.s32 %s11, 2
        // Predicated region
        $region98: #{gnn_forward.3} parent=96 // pred_check
          %p1037 = pneg %p174
        $region99: #{gnn_forward.3} parent=96 // pred_check_branch
          %1039 = sbr.rel (%p1037) target = $region101
        $region100: #{gnn_forward.3} parent=96 // pred_region
          %s1040 = smul.u32 16, %s22
          %p1041 = scmp.lt.s32.totalorder %s1040, 31
          %s1042 = scalar_select %p1041, %s1040, 31
          %s1043 = smul.addr %s1042, 8
          %s1044 = scalar_lea.vmem %s5, %s1043
        $region101: #{gnn_forward.3} parent=96 // pred_fallthru
          _
      $region97: #{gnn_forward.3} parent=5 // pred_fallthru
        _
    $region6: #{gnn_forward.3} parent=1 // loop_footer
      %s15 = sadd.s32 1, %s11
    $region7: #{gnn_forward.3} parent=1 // loop_footer_branch
      %10 = sbr.rel target = $region3
    $region8: #{gnn_forward.3} parent=1 // loop_exit
      _

// kernel: gnn_forward.2
$region0: #{gnn_forward.2}
  #allocation0 [shape = 'u32[]', space=smem, size = 0x4, offset = 0x4, fixed_abs, tag = 'smem constant byte address 0x4 - core index']
  #allocation1 [shape = 'u32[144,128]{1,0:T(1,128)}', space=vmem, size = 0x12000, scoped, tag = 'internal scratch']
  #allocation2 [shape = 'f32[128,128]{1,0:T(8,128)}', space=vmem, size = 0x10000, scoped, tag = 'scratch operand']
  %s0 = inlined_call_operand.vmem [shape: bf16[256,256], index: 0, kind: input, shape index: {}]
  %s1 = inlined_call_operand.vmem [shape: bf16[256,128], index: 1, kind: input, shape index: {}, may-alias: {1,2}]
  %s2 = inlined_call_operand.vmem [shape: bf16[256,128], index: 2, kind: input, shape index: {}, may-alias: {1,2}]
  %s3 = inlined_call_operand.vmem [shape: bf16[256,128], index: 3, kind: input, shape index: {}]
  %s4 = inlined_call_operand.vmem [shape: f32[1,128], index: 4, kind: input, shape index: {}]
  %s5 = inlined_call_operand.vmem [shape: bf16[256,128], index: 5, kind: output, shape index: {}]
  %s6 = sld [smem:[#allocation0]]
  $region102: #{gnn_forward.2} parent=0
    _
  %s8 = ssub.s32 1, %s6
  %s9 = scalar_select 0, %s8, %s6
  $region1: #{gnn_forward.2} parent=0
    #allocation3 [shape = 'u8[65536]{0}', space=vmem, size = 0x10000, scoped, tag = 'input window, operand 0']
    loop: start=0, step=1, limit=6
    $region2: #{gnn_forward.2} parent=1 // loop_pre_header
      _
    $region3: #{gnn_forward.2} parent=1 // loop_header
      %s11 = sphi 0, %s15
      %p12 = scmp.ge.s32.totalorder %s11, 6
      %s18 = sphi 0, %s30
      %s19 = sphi 0, %s26
      %s20 = sphi 0, %s18
      %s21 = sphi 0, %s19
      %s22 = sphi 0, %s20
      %s23 = sphi 0, %s21
      %s35 = sphi 0, %s37
      %s38 = sphi 0, %s35
      %s39 = sphi 0, %s38
      %s55 = sphi 0, %s39
      %s61 = sphi 0, %s63
      %s64 = sphi 0, %s61
      %s65 = sphi 0, %s64
      %s81 = sphi 0, %s65
      %s87 = sphi 0, %s89
      %s90 = sphi 0, %s87
      %s91 = sphi 0, %s90
      %s107 = sphi 0, %s91
      %s111 = sphi 0, %s111
      %s113 = sphi 0, %s111
      %s114 = sphi 0, %s113
      %s128 = sphi 0, %s114
      %s132 = sphi 0, %s132
      %s134 = sphi 0, %s132
      %s135 = sphi 0, %s134
      %s149 = sphi 0, %s135
      %s155 = sphi 0, %s157
      %s158 = sphi 0, %s155
      %s159 = sphi 0, %s158
      %s175 = sphi 0, %s159
    $region4: #{gnn_forward.2} parent=1 // loop_header_branch
      %14 = sbr.rel (%p12) target = $region8
    $region5: #{gnn_forward.2} parent=1 // loop_body
      %s16 = ssub.s32 %s11, 1
      %s17 = ssub.s32 %s11, 2
      %s24 = sadd.s32 1, %s19
      %p25 = scmp.ge.s32.totalorder %s24, 2
      %s26 = scalar_select %p25, 0, %s24
      %s27 = sadd.s32 1, %s18
      %s28 = scalar_select %p25, %s27, %s18
      %p29 = scmp.ge.s32.totalorder %s28, 2
      %s30 = scalar_select %p29, 0, %s28
      %s31 = ssub.s32 %s18, %s30
      %s32 = ssub.s32 %s19, %s26
      %s33 = sor.u32 %s31, %s32
      %p34 = scmp.eq.s32.totalorder %s33, 0
      %s36 = sadd.s32 %s35, 1
      %s37 = scalar_select %p34, %s35, %s36
      %p40 = pneg %p34
      %p41 = scmp.eq.s32.totalorder %s11, 3
      %p42 = por %p40, %p41
      %p43 = scmp.ne.s32.totalorder %s35, %s38
      %p44 = scmp.eq.s32.totalorder %s11, 0
      %p45 = por %p43, %p44
      %p46 = scmp.ne.s32.totalorder %s35, %s38
      %p47 = scmp.eq.s32.totalorder %s16, 3
      %p48 = por %p46, %p47
      %p49 = scmp.ne.s32.totalorder %s38, %s39
      %p50 = scmp.eq.s32.totalorder %s16, 0
      %p51 = por %p49, %p50
      %p52 = scmp.ne.s32.totalorder %s38, %s39
      %p53 = scmp.eq.s32.totalorder %s17, 3
      %p54 = por %p52, %p53
      %p56 = scmp.ne.s32.totalorder %s39, %s55
      %p57 = scmp.eq.s32.totalorder %s17, 0
      %p58 = por %p56, %p57
      %s59 = ssub.s32 %s19, %s26
      %p60 = scmp.eq.s32.totalorder %s59, 0
      %s62 = sadd.s32 %s61, 1
      %s63 = scalar_select %p60, %s61, %s62
      %p66 = pneg %p60
      %p67 = scmp.eq.s32.totalorder %s11, 3
      %p68 = por %p66, %p67
      %p69 = scmp.ne.s32.totalorder %s61, %s64
      %p70 = scmp.eq.s32.totalorder %s11, 0
      %p71 = por %p69, %p70
      %p72 = scmp.ne.s32.totalorder %s61, %s64
      %p73 = scmp.eq.s32.totalorder %s16, 3
      %p74 = por %p72, %p73
      %p75 = scmp.ne.s32.totalorder %s64, %s65
      %p76 = scmp.eq.s32.totalorder %s16, 0
      %p77 = por %p75, %p76
      %p78 = scmp.ne.s32.totalorder %s64, %s65
      %p79 = scmp.eq.s32.totalorder %s17, 3
      %p80 = por %p78, %p79
      %p82 = scmp.ne.s32.totalorder %s65, %s81
      %p83 = scmp.eq.s32.totalorder %s17, 0
      %p84 = por %p82, %p83
      %s85 = ssub.s32 %s18, %s30
      %p86 = scmp.eq.s32.totalorder %s85, 0
      %s88 = sadd.s32 %s87, 1
      %s89 = scalar_select %p86, %s87, %s88
      %p92 = pneg %p86
      %p93 = scmp.eq.s32.totalorder %s11, 3
      %p94 = por %p92, %p93
      %p95 = scmp.ne.s32.totalorder %s87, %s90
      %p96 = scmp.eq.s32.totalorder %s11, 0
      %p97 = por %p95, %p96
      %p98 = scmp.ne.s32.totalorder %s87, %s90
      %p99 = scmp.eq.s32.totalorder %s16, 3
      %p100 = por %p98, %p99
      %p101 = scmp.ne.s32.totalorder %s90, %s91
      %p102 = scmp.eq.s32.totalorder %s16, 0
      %p103 = por %p101, %p102
      %p104 = scmp.ne.s32.totalorder %s90, %s91
      %p105 = scmp.eq.s32.totalorder %s17, 3
      %p106 = por %p104, %p105
      %p108 = scmp.ne.s32.totalorder %s91, %s107
      %p109 = scmp.eq.s32.totalorder %s17, 0
      %p110 = por %p108, %p109
      %s112 = sadd.s32 %s111, 1
      %p115 = scmp.eq.s32.totalorder %s11, 3
      %p116 = scmp.ne.s32.totalorder %s111, %s113
      %p117 = scmp.eq.s32.totalorder %s11, 0
      %p118 = por %p116, %p117
      %p119 = scmp.ne.s32.totalorder %s111, %s113
      %p120 = scmp.eq.s32.totalorder %s16, 3
      %p121 = por %p119, %p120
      %p122 = scmp.ne.s32.totalorder %s113, %s114
      %p123 = scmp.eq.s32.totalorder %s16, 0
      %p124 = por %p122, %p123
      %p125 = scmp.ne.s32.totalorder %s113, %s114
      %p126 = scmp.eq.s32.totalorder %s17, 3
      %p127 = por %p125, %p126
      %p129 = scmp.ne.s32.totalorder %s114, %s128
      %p130 = scmp.eq.s32.totalorder %s17, 0
      %p131 = por %p129, %p130
      %s133 = sadd.s32 %s132, 1
      %p136 = scmp.eq.s32.totalorder %s11, 3
      %p137 = scmp.ne.s32.totalorder %s132, %s134
      %p138 = scmp.eq.s32.totalorder %s11, 0
      %p139 = por %p137, %p138
      %p140 = scmp.ne.s32.totalorder %s132, %s134
      %p141 = scmp.eq.s32.totalorder %s16, 3
      %p142 = por %p140, %p141
      %p143 = scmp.ne.s32.totalorder %s134, %s135
      %p144 = scmp.eq.s32.totalorder %s16, 0
      %p145 = por %p143, %p144
      %p146 = scmp.ne.s32.totalorder %s134, %s135
      %p147 = scmp.eq.s32.totalorder %s17, 3
      %p148 = por %p146, %p147
      %p150 = scmp.ne.s32.totalorder %s135, %s149
      %p151 = scmp.eq.s32.totalorder %s17, 0
      %p152 = por %p150, %p151
      %s153 = ssub.s32 %s18, %s30
      %p154 = scmp.eq.s32.totalorder %s153, 0
      %s156 = sadd.s32 %s155, 1
      %s157 = scalar_select %p154, %s155, %s156
      %p160 = pneg %p154
      %p161 = scmp.eq.s32.totalorder %s11, 3
      %p162 = por %p160, %p161
      %p163 = scmp.ne.s32.totalorder %s155, %s158
      %p164 = scmp.eq.s32.totalorder %s11, 0
      %p165 = por %p163, %p164
      %p166 = scmp.ne.s32.totalorder %s155, %s158
      %p167 = scmp.eq.s32.totalorder %s16, 3
      %p168 = por %p166, %p167
      %p169 = scmp.ne.s32.totalorder %s158, %s159
      %p170 = scmp.eq.s32.totalorder %s16, 0
      %p171 = por %p169, %p170
      %p172 = scmp.ne.s32.totalorder %s158, %s159
      %p173 = scmp.eq.s32.totalorder %s17, 3
      %p174 = por %p172, %p173
      %p176 = scmp.ne.s32.totalorder %s159, %s175
      %p177 = scmp.eq.s32.totalorder %s17, 0
      %p178 = por %p176, %p177
      %p179 = scmp.le.s32.totalorder 1, %s11
      %p180 = scmp.lt.s32.totalorder %s11, 5
      %p181 = pnand %p179, %p180
      %p182 = pneg %p181
      // Predicated region
      $region9: #{gnn_forward.2} parent=5 // pred_check
        _
      $region10: #{gnn_forward.2} parent=5 // pred_check_branch
        %184 = sbr.rel (%p181) target = $region12
      $region11: #{gnn_forward.2} parent=5 // pred_region
        %s185 = ssub.s32 %s11, 1
        // Predicated region
        $region13: #{gnn_forward.2} parent=11 // pred_check
          %p186 = pneg %p124
        $region14: #{gnn_forward.2} parent=11 // pred_check_branch
          %188 = sbr.rel (%p186) target = $region16
        $region15: #{gnn_forward.2} parent=11 // pred_region
          _
        $region16: #{gnn_forward.2} parent=11 // pred_fallthru
          _
        // Predicated region
        $region17: #{gnn_forward.2} parent=11 // pred_check
          %p189 = pneg %p145
        $region18: #{gnn_forward.2} parent=11 // pred_check_branch
          %191 = sbr.rel (%p189) target = $region20
        $region19: #{gnn_forward.2} parent=11 // pred_region
          _
        $region20: #{gnn_forward.2} parent=11 // pred_fallthru
          _
      $region12: #{gnn_forward.2} parent=5 // pred_fallthru
        _
      %p192 = scmp.lt.s32.totalorder %s11, 4
      // Predicated region
      $region21: #{gnn_forward.2} parent=5 // pred_check
        %p193 = pneg %p192
      $region22: #{gnn_forward.2} parent=5 // pred_check_branch
        %195 = sbr.rel (%p193) target = $region24
      $region23: #{gnn_forward.2} parent=5 // pred_region
        // Predicated region
        $region25: #{gnn_forward.2} parent=23 // pred_check
          %p196 = pneg %p45
        $region26: #{gnn_forward.2} parent=23 // pred_check_branch
          %198 = sbr.rel (%p196) target = $region28
        $region27: #{gnn_forward.2} parent=23 // pred_region
          %s199 = sand.u32 %s35, 1
          %s200 = sand.u32 %s35, 1
          %s201 = smul.addr %s200, 64
          %s202 = scalar_lea.vmem [#allocation3], %s201
          %s203 = smul.u32 16, %s18
          %s204 = smul.addr %s203, 2
          %s205 = sadd.s32 %s19, %s204
          %s206 = smul.addr %s205, 4
          %s207 = scalar_lea.vmem %s0, %s206
          // Predicated region
          $region29: #{gnn_forward.2} parent=27 // pred_check
            _
          $region30: #{gnn_forward.2} parent=27 // pred_check_branch
            %209 = sbr.rel (0) target = $region32
          $region31: #{gnn_forward.2} parent=27 // pred_region
            // Predicated region
            $region33: #{gnn_forward.2} parent=31 // pred_check
              _
            $region34: #{gnn_forward.2} parent=31 // pred_check_branch
              %211 = sbr.rel target = $region36
            $region35: #{gnn_forward.2} parent=31 // pred_region
              // Predicated region
              $region48: #{gnn_forward.2} parent=35 // pred_check
                _
              $region49: #{gnn_forward.2} parent=35 // pred_check_branch
                %256 = sbr.rel (0) target = $region51
              $region50: #{gnn_forward.2} parent=35 // pred_region
                loop: start=0, step=1, limit=1
                $region52: #{gnn_forward.2} parent=50 // loop_pre_header
                  _
                $region53: #{gnn_forward.2} parent=50 // loop_header
                  %s258 = sphi 0, %s262
                  %p259 = scmp.ge.s32.totalorder %s258, 1
                  %s263 = sphi %s207, %s207
                  %s264 = sphi %s202, %s202
                $region54: #{gnn_forward.2} parent=50 // loop_header_branch
                  %261 = sbr.rel (%p259) target = $region58
                $region55: #{gnn_forward.2} parent=50 // loop_body
                  _
                $region56: #{gnn_forward.2} parent=50 // loop_footer
                  %s262 = sadd.s32 1, %s258
                $region57: #{gnn_forward.2} parent=50 // loop_footer_branch
                  %257 = sbr.rel target = $region53
                $region58: #{gnn_forward.2} parent=50 // loop_exit
                  _
                loop: start=0, step=1, limit=1
                $region59: #{gnn_forward.2} parent=50 // loop_pre_header
                  _
                $region60: #{gnn_forward.2} parent=50 // loop_header
                  %s267 = sphi 0, %s271
                  %p268 = scmp.ge.s32.totalorder %s267, 1
                  %s272 = sphi %s207, %s207
                  %s273 = sphi %s202, %s202
                $region61: #{gnn_forward.2} parent=50 // loop_header_branch
                  %270 = sbr.rel (%p268) target = $region65
                $region62: #{gnn_forward.2} parent=50 // loop_body
                  %v274 = vld [vmem:[%s272] sm:$0xf]
                  %275 = vst [vmem:[%s273] sm:$0xf] %v274
                  %v276 = vld [vmem:[%s272 + $0x8] sm:$0xf]
                  %277 = vst [vmem:[%s273 + $0x4] sm:$0xf] %v276
                  %v278 = vld [vmem:[%s272 + $0x10] sm:$0xf]
                  %279 = vst [vmem:[%s273 + $0x8] sm:$0xf] %v278
                  %v280 = vld [vmem:[%s272 + $0x18] sm:$0xf]
                  %281 = vst [vmem:[%s273 + $0xc] sm:$0xf] %v280
                  %v282 = vld [vmem:[%s272 + $0x20] sm:$0xf]
                  %283 = vst [vmem:[%s273 + $0x10] sm:$0xf] %v282
                  %v284 = vld [vmem:[%s272 + $0x28] sm:$0xf]
                  %285 = vst [vmem:[%s273 + $0x14] sm:$0xf] %v284
                  %v286 = vld [vmem:[%s272 + $0x30] sm:$0xf]
                  %287 = vst [vmem:[%s273 + $0x18] sm:$0xf] %v286
                  %v288 = vld [vmem:[%s272 + $0x38] sm:$0xf]
                  %289 = vst [vmem:[%s273 + $0x1c] sm:$0xf] %v288
                  %v290 = vld [vmem:[%s272 + $0x40] sm:$0xf]
                  %291 = vst [vmem:[%s273 + $0x20] sm:$0xf] %v290
                  %v292 = vld [vmem:[%s272 + $0x48] sm:$0xf]
                  %293 = vst [vmem:[%s273 + $0x24] sm:$0xf] %v292
                  %v294 = vld [vmem:[%s272 + $0x50] sm:$0xf]
                  %295 = vst [vmem:[%s273 + $0x28] sm:$0xf] %v294
                  %v296 = vld [vmem:[%s272 + $0x58] sm:$0xf]
                  %297 = vst [vmem:[%s273 + $0x2c] sm:$0xf] %v296
                  %v298 = vld [vmem:[%s272 + $0x60] sm:$0xf]
                  %299 = vst [vmem:[%s273 + $0x30] sm:$0xf] %v298
                  %v300 = vld [vmem:[%s272 + $0x68] sm:$0xf]
                  %301 = vst [vmem:[%s273 + $0x34] sm:$0xf] %v300
                  %v302 = vld [vmem:[%s272 + $0x70] sm:$0xf]
                  %303 = vst [vmem:[%s273 + $0x38] sm:$0xf] %v302
                  %v304 = vld [vmem:[%s272 + $0x78] sm:$0xf]
                  %305 = vst [vmem:[%s273 + $0x3c] sm:$0xf] %v304
                $region63: #{gnn_forward.2} parent=50 // loop_footer
                  %s271 = sadd.s32 1, %s267
                $region64: #{gnn_forward.2} parent=50 // loop_footer_branch
                  %266 = sbr.rel target = $region60
                $region65: #{gnn_forward.2} parent=50 // loop_exit
                  _
              $region51: #{gnn_forward.2} parent=35 // pred_fallthru
                _
            $region36: #{gnn_forward.2} parent=31 // pred_fallthru
              _
            // Predicated region
            $region37: #{gnn_forward.2} parent=31 // pred_check
              _
            $region38: #{gnn_forward.2} parent=31 // pred_check_branch
              %213 = sbr.rel (0) target = $region40
            $region39: #{gnn_forward.2} parent=31 // pred_region
              loop: start=0, step=1, limit=1
              $region41: #{gnn_forward.2} parent=39 // loop_pre_header
                _
              $region42: #{gnn_forward.2} parent=39 // loop_header
                %s216 = sphi 0, %s220
                %p217 = scmp.ge.s32.totalorder %s216, 1
                %s221 = sphi %s207, %s207
                %s222 = sphi %s202, %s202
              $region43: #{gnn_forward.2} parent=39 // loop_header_branch
                %219 = sbr.rel (%p217) target = $region47
              $region44: #{gnn_forward.2} parent=39 // loop_body
                %v223 = vld [vmem:[%s221] sm:$0xf]
                %224 = vst [vmem:[%s222] sm:$0xf] %v223
                %v225 = vld [vmem:[%s221 + $0x8] sm:$0xf]
                %226 = vst [vmem:[%s222 + $0x4] sm:$0xf] %v225
                %v227 = vld [vmem:[%s221 + $0x10] sm:$0xf]
                %228 = vst [vmem:[%s222 + $0x8] sm:$0xf] %v227
                %v229 = vld [vmem:[%s221 + $0x18] sm:$0xf]
                %230 = vst [vmem:[%s222 + $0xc] sm:$0xf] %v229
                %v231 = vld [vmem:[%s221 + $0x20] sm:$0xf]
                %232 = vst [vmem:[%s222 + $0x10] sm:$0xf] %v231
                %v233 = vld [vmem:[%s221 + $0x28] sm:$0xf]
                %234 = vst [vmem:[%s222 + $0x14] sm:$0xf] %v233
                %v235 = vld [vmem:[%s221 + $0x30] sm:$0xf]
                %236 = vst [vmem:[%s222 + $0x18] sm:$0xf] %v235
                %v237 = vld [vmem:[%s221 + $0x38] sm:$0xf]
                %238 = vst [vmem:[%s222 + $0x1c] sm:$0xf] %v237
                %v239 = vld [vmem:[%s221 + $0x40] sm:$0xf]
                %240 = vst [vmem:[%s222 + $0x20] sm:$0xf] %v239
                %v241 = vld [vmem:[%s221 + $0x48] sm:$0xf]
                %242 = vst [vmem:[%s222 + $0x24] sm:$0xf] %v241
                %v243 = vld [vmem:[%s221 + $0x50] sm:$0xf]
                %244 = vst [vmem:[%s222 + $0x28] sm:$0xf] %v243
                %v245 = vld [vmem:[%s221 + $0x58] sm:$0xf]
                %246 = vst [vmem:[%s222 + $0x2c] sm:$0xf] %v245
                %v247 = vld [vmem:[%s221 + $0x60] sm:$0xf]
                %248 = vst [vmem:[%s222 + $0x30] sm:$0xf] %v247
                %v249 = vld [vmem:[%s221 + $0x68] sm:$0xf]
                %250 = vst [vmem:[%s222 + $0x34] sm:$0xf] %v249
                %v251 = vld [vmem:[%s221 + $0x70] sm:$0xf]
                %252 = vst [vmem:[%s222 + $0x38] sm:$0xf] %v251
                %v253 = vld [vmem:[%s221 + $0x78] sm:$0xf]
                %254 = vst [vmem:[%s222 + $0x3c] sm:$0xf] %v253
              $region45: #{gnn_forward.2} parent=39 // loop_footer
                %s220 = sadd.s32 1, %s216
              $region46: #{gnn_forward.2} parent=39 // loop_footer_branch
                %215 = sbr.rel target = $region42
              $region47: #{gnn_forward.2} parent=39 // loop_exit
                _
            $region40: #{gnn_forward.2} parent=31 // pred_fallthru
              _
          $region32: #{gnn_forward.2} parent=27 // pred_fallthru
            _
          %306 = vnop
        $region28: #{gnn_forward.2} parent=23 // pred_fallthru
          _
        // Predicated region
        $region66: #{gnn_forward.2} parent=23 // pred_check
          %p307 = pneg %p71
        $region67: #{gnn_forward.2} parent=23 // pred_check_branch
          %309 = sbr.rel (%p307) target = $region69
        $region68: #{gnn_forward.2} parent=23 // pred_region
          %s310 = smul.u32 16, %s19
          %p311 = scmp.lt.s32.totalorder %s310, 31
          %s312 = scalar_select %p311, %s310, 31
          %s313 = smul.addr %s312, 4
          %s314 = scalar_lea.vmem %s1, %s313
          %s315 = smul.u32 16, %s19
        $region69: #{gnn_forward.2} parent=23 // pred_fallthru
          _
        // Predicated region
        $region70: #{gnn_forward.2} parent=23 // pred_check
          %p316 = pneg %p97
        $region71: #{gnn_forward.2} parent=23 // pred_check_branch
          %318 = sbr.rel (%p316) target = $region73
        $region72: #{gnn_forward.2} parent=23 // pred_region
          %s319 = smul.u32 16, %s18
          %p320 = scmp.lt.s32.totalorder %s319, 31
          %s321 = scalar_select %p320, %s319, 31
          %s322 = smul.addr %s321, 4
          %s323 = scalar_lea.vmem %s2, %s322
          %s324 = smul.u32 16, %s18
        $region73: #{gnn_forward.2} parent=23 // pred_fallthru
          _
      $region24: #{gnn_forward.2} parent=5 // pred_fallthru
        _
      %p325 = scmp.le.s32.totalorder 1, %s11
      %p326 = scmp.lt.s32.totalorder %s11, 5
      %p327 = pnand %p325, %p326
      %p328 = pneg %p327
      // Predicated region
      $region74: #{gnn_forward.2} parent=5 // pred_check
        _
      $region75: #{gnn_forward.2} parent=5 // pred_check_branch
        %330 = sbr.rel (%p327) target = $region77
      $region76: #{gnn_forward.2} parent=5 // pred_region
        %s331 = ssub.s32 %s11, 1
        %s332 = sand.u32 %s38, 1
        %s333 = sand.u32 %s38, 1
        %s334 = smul.addr %s333, 64
        %s335 = scalar_lea.vmem [#allocation3], %s334
        // Predicated region
        $region78: #{gnn_forward.2} parent=76 // pred_check
          %p336 = pneg %p51
        $region79: #{gnn_forward.2} parent=76 // pred_check_branch
          %338 = sbr.rel (%p336) target = $region81
        $region80: #{gnn_forward.2} parent=76 // pred_region
          _
        $region81: #{gnn_forward.2} parent=76 // pred_fallthru
          _
        %s339 = sand.u32 %s38, 1
        %s340 = sand.u32 %s38, 1
        %s341 = smul.addr %s340, 64
        %s342 = scalar_lea.vmem [#allocation3], %s341
        %p343 = pneg %p51
        %p344 = pneg %p48
        %s345 = smul.u32 16, %s21
        %p346 = scmp.lt.s32.totalorder %s345, 31
        %s347 = scalar_select %p346, %s345, 31
        %s348 = smul.addr %s347, 4
        %s349 = scalar_lea.vmem %s1, %s348
        %p350 = pneg %p77
        %p351 = pneg %p74
        %s352 = smul.u32 16, %s20
        %p353 = scmp.lt.s32.totalorder %s352, 31
        %s354 = scalar_select %p353, %s352, 31
        %s355 = smul.addr %s354, 4
        %s356 = scalar_lea.vmem %s2, %s355
        %p357 = pneg %p103
        %p358 = pneg %p100
        %p359 = pneg %p124
        %p360 = pneg %p121
        %p361 = pneg %p145
        %p362 = pneg %p142
        %p363 = pneg %p171
        %p364 = pneg %p168
        %s365 = smul.u32 16, %s20
        %p366 = scmp.lt.s32.totalorder %s365, 31
        %s367 = scalar_select %p366, %s365, 31
        %s368 = smul.addr %s367, 4
        %s369 = scalar_lea.vmem %s5, %s368
        %s370 = smul.u32 16, %s20
        %s371 = smul.u32 16, %s21
        %p372 = scmp.lt.s32.totalorder %s371, 31
        %s373 = scalar_select %p372, %s371, 31
        %s374 = smul.addr %s373, 4
        %s375 = scalar_lea.vmem %s1, %s374
        %s376 = smul.u32 16, %s21
        %s377 = smul.u32 16, %s20
        %p378 = scmp.lt.s32.totalorder %s377, 31
        %s379 = scalar_select %p378, %s377, 31
        %s380 = smul.addr %s379, 4
        %s381 = scalar_lea.vmem %s2, %s380
        %s382 = smul.u32 16, %s20
        %s383 = smul.u32 16, %s20
        %p384 = scmp.lt.s32.totalorder %s383, 31
        %s385 = scalar_select %p384, %s383, 31
        %s386 = smul.addr %s385, 4
        %s387 = scalar_lea.vmem %s5, %s386
        %s388 = smul.u32 16, %s20
        %p390 = scmp.eq.s32.totalorder %s21, 0
        // Predicated region
        $region82: #{gnn_forward.2} parent=76 // pred_check
          %p391 = pneg %p390
        $region83: #{gnn_forward.2} parent=76 // pred_check_branch
          %393 = sbr.rel (%p391) target = $region85
        $region84: #{gnn_forward.2} parent=76 // pred_region
          %394 = vst [vmem:[#allocation2] sm:$0xff] 0.0
          %395 = vst [vmem:[#allocation2 + $0x8] sm:$0xff] 0.0
          %396 = vst [vmem:[#allocation2 + $0x10] sm:$0xff] 0.0
          %397 = vst [vmem:[#allocation2 + $0x18] sm:$0xff] 0.0
          %398 = vst [vmem:[#allocation2 + $0x20] sm:$0xff] 0.0
          %399 = vst [vmem:[#allocation2 + $0x28] sm:$0xff] 0.0
          %400 = vst [vmem:[#allocation2 + $0x30] sm:$0xff] 0.0
          %401 = vst [vmem:[#allocation2 + $0x38] sm:$0xff] 0.0
          %402 = vst [vmem:[#allocation2 + $0x40] sm:$0xff] 0.0
          %403 = vst [vmem:[#allocation2 + $0x48] sm:$0xff] 0.0
          %404 = vst [vmem:[#allocation2 + $0x50] sm:$0xff] 0.0
          %405 = vst [vmem:[#allocation2 + $0x58] sm:$0xff] 0.0
          %406 = vst [vmem:[#allocation2 + $0x60] sm:$0xff] 0.0
          %407 = vst [vmem:[#allocation2 + $0x68] sm:$0xff] 0.0
          %408 = vst [vmem:[#allocation2 + $0x70] sm:$0xff] 0.0
          %409 = vst [vmem:[#allocation2 + $0x78] sm:$0xff] 0.0
        $region85: #{gnn_forward.2} parent=76 // pred_fallthru
          _
        %v410 = vld [vmem:[#allocation2] sm:$0xff]
        %v411 = vld [vmem:[#allocation2 + $0x8] sm:$0xff]
        %v412 = vld [vmem:[#allocation2 + $0x10] sm:$0xff]
        %v413 = vld [vmem:[#allocation2 + $0x18] sm:$0xff]
        %v414 = vld [vmem:[#allocation2 + $0x20] sm:$0xff]
        %v415 = vld [vmem:[#allocation2 + $0x28] sm:$0xff]
        %v416 = vld [vmem:[#allocation2 + $0x30] sm:$0xff]
        %v417 = vld [vmem:[#allocation2 + $0x38] sm:$0xff]
        %v418 = vld [vmem:[#allocation2 + $0x40] sm:$0xff]
        %v419 = vld [vmem:[#allocation2 + $0x48] sm:$0xff]
        %v420 = vld [vmem:[#allocation2 + $0x50] sm:$0xff]
        %v421 = vld [vmem:[#allocation2 + $0x58] sm:$0xff]
        %v422 = vld [vmem:[#allocation2 + $0x60] sm:$0xff]
        %v423 = vld [vmem:[#allocation2 + $0x68] sm:$0xff]
        %v424 = vld [vmem:[#allocation2 + $0x70] sm:$0xff]
        %v425 = vld [vmem:[#allocation2 + $0x78] sm:$0xff]
        %v426 = vld [vmem:[%s335] sm:$0xf]
        %v427 = vld [vmem:[%s335 + $0x4] sm:$0xf]
        %v428 = vld [vmem:[%s335 + $0x8] sm:$0xf]
        %v429 = vld [vmem:[%s335 + $0xc] sm:$0xf]
        %v430 = vld [vmem:[%s335 + $0x10] sm:$0xf]
        %v431 = vld [vmem:[%s335 + $0x14] sm:$0xf]
        %v432 = vld [vmem:[%s335 + $0x18] sm:$0xf]
        %v433 = vld [vmem:[%s335 + $0x1c] sm:$0xf]
        %v434 = vld [vmem:[%s335 + $0x20] sm:$0xf]
        %v435 = vld [vmem:[%s335 + $0x24] sm:$0xf]
        %v436 = vld [vmem:[%s335 + $0x28] sm:$0xf]
        %v437 = vld [vmem:[%s335 + $0x2c] sm:$0xf]
        %v438 = vld [vmem:[%s335 + $0x30] sm:$0xf]
        %v439 = vld [vmem:[%s335 + $0x34] sm:$0xf]
        %v440 = vld [vmem:[%s335 + $0x38] sm:$0xf]
        %v441 = vld [vmem:[%s335 + $0x3c] sm:$0xf]
        %v442 = vld [vmem:[%s375] sm:$0xf]
        %v443 = vld [vmem:[%s375 + $0x4] sm:$0xf]
        %v444 = vld [vmem:[%s375 + $0x8] sm:$0xf]
        %v445 = vld [vmem:[%s375 + $0xc] sm:$0xf]
        %v446 = vld [vmem:[%s375 + $0x10] sm:$0xf]
        %v447 = vld [vmem:[%s375 + $0x14] sm:$0xf]
        %v448 = vld [vmem:[%s375 + $0x18] sm:$0xf]
        %v449 = vld [vmem:[%s375 + $0x1c] sm:$0xf]
        %v450 = vld [vmem:[%s375 + $0x20] sm:$0xf]
        %v451 = vld [vmem:[%s375 + $0x24] sm:$0xf]
        %v452 = vld [vmem:[%s375 + $0x28] sm:$0xf]
        %v453 = vld [vmem:[%s375 + $0x2c] sm:$0xf]
        %v454 = vld [vmem:[%s375 + $0x30] sm:$0xf]
        %v455 = vld [vmem:[%s375 + $0x34] sm:$0xf]
        %v456 = vld [vmem:[%s375 + $0x38] sm:$0xf]
        %v457 = vld [vmem:[%s375 + $0x3c] sm:$0xf]
        %v474 = vunpack.c.l.b16 %v426
        %v475 = vunpack.c.l.b16 %v427
        %v476 = vunpack.c.l.b16 %v428
        %v477 = vunpack.c.l.b16 %v429
        %v478 = vunpack.c.l.b16 %v430
        %v479 = vunpack.c.l.b16 %v431
        %v480 = vunpack.c.l.b16 %v432
        %v481 = vunpack.c.l.b16 %v433
        %v482 = vunpack.c.l.b16 %v434
        %v483 = vunpack.c.l.b16 %v435
        %v484 = vunpack.c.l.b16 %v436
        %v485 = vunpack.c.l.b16 %v437
        %v486 = vunpack.c.l.b16 %v438
        %v487 = vunpack.c.l.b16 %v439
        %v488 = vunpack.c.l.b16 %v440
        %v489 = vunpack.c.l.b16 %v441
        %v490 = vpack.c.b16 %v475, %v474
        %v491 = vpack.c.b16 %v477, %v476
        %v492 = vpack.c.b16 %v479, %v478
        %v493 = vpack.c.b16 %v481, %v480
        %v494 = vpack.c.b16 %v483, %v482
        %v495 = vpack.c.b16 %v485, %v484
        %v496 = vpack.c.b16 %v487, %v486
        %v497 = vpack.c.b16 %v489, %v488
        %v522 = vunpack.c.l.b16 %v442
        %v523 = vunpack.c.l.b16 %v443
        %v524 = vunpack.c.l.b16 %v444
        %v525 = vunpack.c.l.b16 %v445
        %v526 = vunpack.c.l.b16 %v446
        %v527 = vunpack.c.l.b16 %v447
        %v528 = vunpack.c.l.b16 %v448
        %v529 = vunpack.c.l.b16 %v449
        %v530 = vunpack.c.l.b16 %v450
        %v531 = vunpack.c.l.b16 %v451
        %v532 = vunpack.c.l.b16 %v452
        %v533 = vunpack.c.l.b16 %v453
        %v534 = vunpack.c.l.b16 %v454
        %v535 = vunpack.c.l.b16 %v455
        %v536 = vunpack.c.l.b16 %v456
        %v537 = vunpack.c.l.b16 %v457
        %v538 = vpack.c.b16 %v523, %v522
        %v539 = vpack.c.b16 %v525, %v524
        %v540 = vpack.c.b16 %v527, %v526
        %v541 = vpack.c.b16 %v529, %v528
        %v542 = vpack.c.b16 %v531, %v530
        %v543 = vpack.c.b16 %v533, %v532
        %v544 = vpack.c.b16 %v535, %v534
        %v545 = vpack.c.b16 %v537, %v536
        %554 = vmatprep.subr.bf16.mxu0 0
        %555 = vmatpush1.bf16.msra.mxu0 %v538
        %556 = vmatprep.subr.bf16.mxu0 0
        %557 = vmatpush1.bf16.msra.mxu0 %v539
        %558 = vmatprep.subr.bf16.mxu0 0
        %559 = vmatpush1.bf16.msra.mxu0 %v540
        %560 = vmatprep.subr.bf16.mxu0 0
        %561 = vmatpush1.bf16.msra.mxu0 %v541
        %562 = vmatprep.subr.bf16.mxu0 0
        %563 = vmatpush1.bf16.msra.mxu0 %v542
        %564 = vmatprep.subr.bf16.mxu0 0
        %565 = vmatpush1.bf16.msra.mxu0 %v543
        %566 = vmatprep.subr.bf16.mxu0 0
        %567 = vmatpush1.bf16.msra.mxu0 %v544
        %568 = vmatprep.subr.bf16.mxu0 0
        %569 = vmatpush1.bf16.msra.mxu0 %v545
        %570 = vmatprep.subr.bf16.mxu0 0
        %571 = vmatpush1.bf16.msra.mxu0 0
        %572 = vmatprep.subr.bf16.mxu0 0
        %573 = vmatpush1.bf16.msra.mxu0 0
        %574 = vmatprep.subr.bf16.mxu0 0
        %575 = vmatpush1.bf16.msra.mxu0 0
        %576 = vmatprep.subr.bf16.mxu0 0
        %577 = vmatpush1.bf16.msra.mxu0 0
        %578 = vmatprep.subr.bf16.mxu0 0
        %579 = vmatpush1.bf16.msra.mxu0 0
        %580 = vmatprep.subr.bf16.mxu0 0
        %581 = vmatpush1.bf16.msra.mxu0 0
        %582 = vmatprep.subr.bf16.mxu0 0
        %583 = vmatpush1.bf16.msra.mxu0 0
        %584 = vmatprep.subr.bf16.mxu0 0
        %585 = vmatpush1.bf16.msra.mxu0 0
        %586 = vmatprep.mubr.bf16.mxu0 0
        %587 = vmatmul.mubr.bf16.gmra.mrb[0].mxu0 %v490
        %v588 = vpop.f32.mrb[0].mxu0
        %v589 = vadd.f32 0.0, %v588
        %v590 = vpop.f32.mrb[0].mxu0
        %v591 = vpop.f32.mrb[0].mxu0
        %v592 = vadd.f32 0.0, %v591
        %v593 = vpop.f32.mrb[0].mxu0
        %594 = vmatprep.mubr.bf16.mxu0 0
        %595 = vmatmul.mubr.bf16.gmra.mrb[0].mxu0 %v491
        %v596 = vpop.f32.mrb[0].mxu0
        %v597 = vadd.f32 0.0, %v596
        %v598 = vpop.f32.mrb[0].mxu0
        %v599 = vpop.f32.mrb[0].mxu0
        %v600 = vadd.f32 0.0, %v599
        %v601 = vpop.f32.mrb[0].mxu0
        %602 = vmatprep.mubr.bf16.mxu0 0
        %603 = vmatmul.mubr.bf16.gmra.mrb[0].mxu0 %v492
        %v604 = vpop.f32.mrb[0].mxu0
        %v605 = vadd.f32 0.0, %v604
        %v606 = vpop.f32.mrb[0].mxu0
        %v607 = vpop.f32.mrb[0].mxu0
        %v608 = vadd.f32 0.0, %v607
        %v609 = vpop.f32.mrb[0].mxu0
        %610 = vmatprep.mubr.bf16.mxu0 0
        %611 = vmatmul.mubr.bf16.gmra.mrb[0].mxu0 %v493
        %v612 = vpop.f32.mrb[0].mxu0
        %v613 = vadd.f32 0.0, %v612
        %v614 = vpop.f32.mrb[0].mxu0
        %v615 = vpop.f32.mrb[0].mxu0
        %v616 = vadd.f32 0.0, %v615
        %v617 = vpop.f32.mrb[0].mxu0
        %618 = vmatprep.mubr.bf16.mxu0 0
        %619 = vmatmul.mubr.bf16.gmra.mrb[0].mxu0 %v494
        %v620 = vpop.f32.mrb[0].mxu0
        %v621 = vadd.f32 0.0, %v620
        %v622 = vpop.f32.mrb[0].mxu0
        %v623 = vpop.f32.mrb[0].mxu0
        %v624 = vadd.f32 0.0, %v623
        %v625 = vpop.f32.mrb[0].mxu0
        %626 = vmatprep.mubr.bf16.mxu0 0
        %627 = vmatmul.mubr.bf16.gmra.mrb[0].mxu0 %v495
        %v628 = vpop.f32.mrb[0].mxu0
        %v629 = vadd.f32 0.0, %v628
        %v630 = vpop.f32.mrb[0].mxu0
        %v631 = vpop.f32.mrb[0].mxu0
        %v632 = vadd.f32 0.0, %v631
        %v633 = vpop.f32.mrb[0].mxu0
        %634 = vmatprep.mubr.bf16.mxu0 0
        %635 = vmatmul.mubr.bf16.gmra.mrb[0].mxu0 %v496
        %v636 = vpop.f32.mrb[0].mxu0
        %v637 = vadd.f32 0.0, %v636
        %v638 = vpop.f32.mrb[0].mxu0
        %v639 = vpop.f32.mrb[0].mxu0
        %v640 = vadd.f32 0.0, %v639
        %v641 = vpop.f32.mrb[0].mxu0
        %642 = vmatprep.mubr.bf16.mxu0 0
        %643 = vmatmul.mubr.bf16.gmra.mrb[0].mxu0 %v497
        %v644 = vpop.f32.mrb[0].mxu0
        %v645 = vadd.f32 0.0, %v644
        %v646 = vpop.f32.mrb[0].mxu0
        %v647 = vpop.f32.mrb[0].mxu0
        %v648 = vadd.f32 0.0, %v647
        %v649 = vpop.f32.mrb[0].mxu0
        %650 = vdwg.mxu0
        %v651 = vadd.f32 %v410, %v589
        %v652 = vadd.f32 %v411, %v592
        %v653 = vadd.f32 %v412, %v597
        %v654 = vadd.f32 %v413, %v600
        %v655 = vadd.f32 %v414, %v605
        %v656 = vadd.f32 %v415, %v608
        %v657 = vadd.f32 %v416, %v613
        %v658 = vadd.f32 %v417, %v616
        %v659 = vadd.f32 %v418, %v621
        %v660 = vadd.f32 %v419, %v624
        %v661 = vadd.f32 %v420, %v629
        %v662 = vadd.f32 %v421, %v632
        %v663 = vadd.f32 %v422, %v637
        %v664 = vadd.f32 %v423, %v640
        %v665 = vadd.f32 %v424, %v645
        %v666 = vadd.f32 %v425, %v648
        %667 = vst [vmem:[#allocation2] sm:$0xff] %v651
        %668 = vst [vmem:[#allocation2 + $0x8] sm:$0xff] %v652
        %669 = vst [vmem:[#allocation2 + $0x10] sm:$0xff] %v653
        %670 = vst [vmem:[#allocation2 + $0x18] sm:$0xff] %v654
        %671 = vst [vmem:[#allocation2 + $0x20] sm:$0xff] %v655
        %672 = vst [vmem:[#allocation2 + $0x28] sm:$0xff] %v656
        %673 = vst [vmem:[#allocation2 + $0x30] sm:$0xff] %v657
        %674 = vst [vmem:[#allocation2 + $0x38] sm:$0xff] %v658
        %675 = vst [vmem:[#allocation2 + $0x40] sm:$0xff] %v659
        %676 = vst [vmem:[#allocation2 + $0x48] sm:$0xff] %v660
        %677 = vst [vmem:[#allocation2 + $0x50] sm:$0xff] %v661
        %678 = vst [vmem:[#allocation2 + $0x58] sm:$0xff] %v662
        %679 = vst [vmem:[#allocation2 + $0x60] sm:$0xff] %v663
        %680 = vst [vmem:[#allocation2 + $0x68] sm:$0xff] %v664
        %681 = vst [vmem:[#allocation2 + $0x70] sm:$0xff] %v665
        %682 = vst [vmem:[#allocation2 + $0x78] sm:$0xff] %v666
        %p683 = scmp.eq.s32.totalorder %s21, 1
        // Predicated region
        $region86: #{gnn_forward.2} parent=76 // pred_check
          %p684 = pneg %p683
        $region87: #{gnn_forward.2} parent=76 // pred_check_branch
          %686 = sbr.rel (%p684) target = $region89
        $region88: #{gnn_forward.2} parent=76 // pred_region
          %v687 = vld [vmem:[#allocation2] sm:$0xff]
          %v688 = vld [vmem:[#allocation2 + $0x8] sm:$0xff]
          %v689 = vld [vmem:[#allocation2 + $0x10] sm:$0xff]
          %v690 = vld [vmem:[#allocation2 + $0x18] sm:$0xff]
          %v691 = vld [vmem:[#allocation2 + $0x20] sm:$0xff]
          %v692 = vld [vmem:[#allocation2 + $0x28] sm:$0xff]
          %v693 = vld [vmem:[#allocation2 + $0x30] sm:$0xff]
          %v694 = vld [vmem:[#allocation2 + $0x38] sm:$0xff]
          %v695 = vld [vmem:[#allocation2 + $0x40] sm:$0xff]
          %v696 = vld [vmem:[#allocation2 + $0x48] sm:$0xff]
          %v697 = vld [vmem:[#allocation2 + $0x50] sm:$0xff]
          %v698 = vld [vmem:[#allocation2 + $0x58] sm:$0xff]
          %v699 = vld [vmem:[#allocation2 + $0x60] sm:$0xff]
          %v700 = vld [vmem:[#allocation2 + $0x68] sm:$0xff]
          %v701 = vld [vmem:[#allocation2 + $0x70] sm:$0xff]
          %v702 = vld [vmem:[#allocation2 + $0x78] sm:$0xff]
          %v703 = vpack.c.bf16 %v688, %v687
          %v704 = vpack.c.bf16 %v690, %v689
          %v705 = vpack.c.bf16 %v692, %v691
          %v706 = vpack.c.bf16 %v694, %v693
          %v707 = vpack.c.bf16 %v696, %v695
          %v708 = vpack.c.bf16 %v698, %v697
          %v709 = vpack.c.bf16 %v700, %v699
          %v710 = vpack.c.bf16 %v702, %v701
          %v711 = vld [vmem:[%s381] sm:$0xf]
          %v712 = vld [vmem:[%s381 + $0x4] sm:$0xf]
          %v713 = vld [vmem:[%s381 + $0x8] sm:$0xf]
          %v714 = vld [vmem:[%s381 + $0xc] sm:$0xf]
          %v715 = vld [vmem:[%s381 + $0x10] sm:$0xf]
          %v716 = vld [vmem:[%s381 + $0x14] sm:$0xf]
          %v717 = vld [vmem:[%s381 + $0x18] sm:$0xf]
          %v718 = vld [vmem:[%s381 + $0x1c] sm:$0xf]
          %v719 = vld [vmem:[%s381 + $0x20] sm:$0xf]
          %v720 = vld [vmem:[%s381 + $0x24] sm:$0xf]
          %v721 = vld [vmem:[%s381 + $0x28] sm:$0xf]
          %v722 = vld [vmem:[%s381 + $0x2c] sm:$0xf]
          %v723 = vld [vmem:[%s381 + $0x30] sm:$0xf]
          %v724 = vld [vmem:[%s381 + $0x34] sm:$0xf]
          %v725 = vld [vmem:[%s381 + $0x38] sm:$0xf]
          %v726 = vld [vmem:[%s381 + $0x3c] sm:$0xf]
          %v743 = vunpack.c.l.b16 %v711
          %v744 = vunpack.c.l.b16 %v712
          %v745 = vunpack.c.l.b16 %v713
          %v746 = vunpack.c.l.b16 %v714
          %v747 = vunpack.c.l.b16 %v715
          %v748 = vunpack.c.l.b16 %v716
          %v749 = vunpack.c.l.b16 %v717
          %v750 = vunpack.c.l.b16 %v718
          %v751 = vunpack.c.l.b16 %v719
          %v752 = vunpack.c.l.b16 %v720
          %v753 = vunpack.c.l.b16 %v721
          %v754 = vunpack.c.l.b16 %v722
          %v755 = vunpack.c.l.b16 %v723
          %v756 = vunpack.c.l.b16 %v724
          %v757 = vunpack.c.l.b16 %v725
          %v758 = vunpack.c.l.b16 %v726
          %v759 = vpack.c.b16 %v744, %v743
          %v760 = vpack.c.b16 %v746, %v745
          %v761 = vpack.c.b16 %v748, %v747
          %v762 = vpack.c.b16 %v750, %v749
          %v763 = vpack.c.b16 %v752, %v751
          %v764 = vpack.c.b16 %v754, %v753
          %v765 = vpack.c.b16 %v756, %v755
          %v766 = vpack.c.b16 %v758, %v757
          %v775 = vld [vmem:[%s3] sm:$0xf]
          %v776 = vld [vmem:[%s3 + $0x4] sm:$0xf]
          %v777 = vld [vmem:[%s3 + $0x8] sm:$0xf]
          %v778 = vld [vmem:[%s3 + $0xc] sm:$0xf]
          %v779 = vld [vmem:[%s3 + $0x10] sm:$0xf]
          %v780 = vld [vmem:[%s3 + $0x14] sm:$0xf]
          %v781 = vld [vmem:[%s3 + $0x18] sm:$0xf]
          %v782 = vld [vmem:[%s3 + $0x1c] sm:$0xf]
          %v783 = vld [vmem:[%s3 + $0x20] sm:$0xf]
          %v784 = vld [vmem:[%s3 + $0x24] sm:$0xf]
          %v785 = vld [vmem:[%s3 + $0x28] sm:$0xf]
          %v786 = vld [vmem:[%s3 + $0x2c] sm:$0xf]
          %v787 = vld [vmem:[%s3 + $0x30] sm:$0xf]
          %v788 = vld [vmem:[%s3 + $0x34] sm:$0xf]
          %v789 = vld [vmem:[%s3 + $0x38] sm:$0xf]
          %v790 = vld [vmem:[%s3 + $0x3c] sm:$0xf]
          %v791 = vld [vmem:[%s3 + $0x40] sm:$0xf]
          %v792 = vld [vmem:[%s3 + $0x44] sm:$0xf]
          %v793 = vld [vmem:[%s3 + $0x48] sm:$0xf]
          %v794 = vld [vmem:[%s3 + $0x4c] sm:$0xf]
          %v795 = vld [vmem:[%s3 + $0x50] sm:$0xf]
          %v796 = vld [vmem:[%s3 + $0x54] sm:$0xf]
          %v797 = vld [vmem:[%s3 + $0x58] sm:$0xf]
          %v798 = vld [vmem:[%s3 + $0x5c] sm:$0xf]
          %v799 = vld [vmem:[%s3 + $0x60] sm:$0xf]
          %v800 = vld [vmem:[%s3 + $0x64] sm:$0xf]
          %v801 = vld [vmem:[%s3 + $0x68] sm:$0xf]
          %v802 = vld [vmem:[%s3 + $0x6c] sm:$0xf]
          %v803 = vld [vmem:[%s3 + $0x70] sm:$0xf]
          %v804 = vld [vmem:[%s3 + $0x74] sm:$0xf]
          %v805 = vld [vmem:[%s3 + $0x78] sm:$0xf]
          %v806 = vld [vmem:[%s3 + $0x7c] sm:$0xf]
          %v807 = vld [vmem:[%s4] sm:$0x1]
          %v809 = vlaneseq
          %v810 = vshrl.u32 %v809, 7
          %v811 = vsub.s32 0, %v810
          %v812 = vrot.slane %v807, %v811
          %v846 = vunpack.c.l.b16 %v775
          %v847 = vunpack.c.l.b16 %v776
          %v848 = vunpack.c.l.b16 %v777
          %v849 = vunpack.c.l.b16 %v778
          %v850 = vunpack.c.l.b16 %v779
          %v851 = vunpack.c.l.b16 %v780
          %v852 = vunpack.c.l.b16 %v781
          %v853 = vunpack.c.l.b16 %v782
          %v854 = vunpack.c.l.b16 %v783
          %v855 = vunpack.c.l.b16 %v784
          %v856 = vunpack.c.l.b16 %v785
          %v857 = vunpack.c.l.b16 %v786
          %v858 = vunpack.c.l.b16 %v787
          %v859 = vunpack.c.l.b16 %v788
          %v860 = vunpack.c.l.b16 %v789
          %v861 = vunpack.c.l.b16 %v790
          %v862 = vunpack.c.l.b16 %v791
          %v863 = vunpack.c.l.b16 %v792
          %v864 = vunpack.c.l.b16 %v793
          %v865 = vunpack.c.l.b16 %v794
          %v866 = vunpack.c.l.b16 %v795
          %v867 = vunpack.c.l.b16 %v796
          %v868 = vunpack.c.l.b16 %v797
          %v869 = vunpack.c.l.b16 %v798
          %v870 = vunpack.c.l.b16 %v799
          %v871 = vunpack.c.l.b16 %v800
          %v872 = vunpack.c.l.b16 %v801
          %v873 = vunpack.c.l.b16 %v802
          %v874 = vunpack.c.l.b16 %v803
          %v875 = vunpack.c.l.b16 %v804
          %v876 = vunpack.c.l.b16 %v805
          %v877 = vunpack.c.l.b16 %v806
          %v878 = vpack.c.b16 %v847, %v846
          %v879 = vpack.c.b16 %v849, %v848
          %v880 = vpack.c.b16 %v851, %v850
          %v881 = vpack.c.b16 %v853, %v852
          %v882 = vpack.c.b16 %v855, %v854
          %v883 = vpack.c.b16 %v857, %v856
          %v884 = vpack.c.b16 %v859, %v858
          %v885 = vpack.c.b16 %v861, %v860
          %v886 = vpack.c.b16 %v863, %v862
          %v887 = vpack.c.b16 %v865, %v864
          %v888 = vpack.c.b16 %v867, %v866
          %v889 = vpack.c.b16 %v869, %v868
          %v890 = vpack.c.b16 %v871, %v870
          %v891 = vpack.c.b16 %v873, %v872
          %v892 = vpack.c.b16 %v875, %v874
          %v893 = vpack.c.b16 %v877, %v876
          %910 = vmatprep.subr.bf16.mxu0 0
          %911 = vmatpush1.bf16.msra.mxu0 %v878
          %912 = vmatprep.subr.bf16.mxu0 0
          %913 = vmatpush1.bf16.msra.mxu0 %v879
          %914 = vmatprep.subr.bf16.mxu0 0
          %915 = vmatpush1.bf16.msra.mxu0 %v880
          %916 = vmatprep.subr.bf16.mxu0 0
          %917 = vmatpush1.bf16.msra.mxu0 %v881
          %918 = vmatprep.subr.bf16.mxu0 0
          %919 = vmatpush1.bf16.msra.mxu0 %v882
          %920 = vmatprep.subr.bf16.mxu0 0
          %921 = vmatpush1.bf16.msra.mxu0 %v883
          %922 = vmatprep.subr.bf16.mxu0 0
          %923 = vmatpush1.bf16.msra.mxu0 %v884
          %924 = vmatprep.subr.bf16.mxu0 0
          %925 = vmatpush1.bf16.msra.mxu0 %v885
          %926 = vmatprep.subr.bf16.mxu0 0
          %927 = vmatpush1.bf16.msra.mxu0 %v886
          %928 = vmatprep.subr.bf16.mxu0 0
          %929 = vmatpush1.bf16.msra.mxu0 %v887
          %930 = vmatprep.subr.bf16.mxu0 0
          %931 = vmatpush1.bf16.msra.mxu0 %v888
          %932 = vmatprep.subr.bf16.mxu0 0
          %933 = vmatpush1.bf16.msra.mxu0 %v889
          %934 = vmatprep.subr.bf16.mxu0 0
          %935 = vmatpush1.bf16.msra.mxu0 %v890
          %936 = vmatprep.subr.bf16.mxu0 0
          %937 = vmatpush1.bf16.msra.mxu0 %v891
          %938 = vmatprep.subr.bf16.mxu0 0
          %939 = vmatpush1.bf16.msra.mxu0 %v892
          %940 = vmatprep.subr.bf16.mxu0 0
          %941 = vmatpush1.bf16.msra.mxu0 %v893
          %942 = vmatprep.mubr.bf16.mxu0 %v759
          %943 = vmatmul.mubr.bf16.gmra.mrb[0].mxu0 %v703
          %v944 = vpop.f32.mrb[0].mxu0
          %v945 = vadd.f32 %v812, %v944
          %v946 = vpop.f32.mrb[0].mxu0
          %v947 = vpop.f32.mrb[0].mxu0
          %v948 = vadd.f32 %v812, %v947
          %v949 = vpop.f32.mrb[0].mxu0
          %950 = vmatprep.mubr.bf16.mxu0 %v760
          %951 = vmatmul.mubr.bf16.gmra.mrb[0].mxu0 %v704
          %v952 = vpop.f32.mrb[0].mxu0
          %v953 = vadd.f32 %v812, %v952
          %v954 = vpop.f32.mrb[0].mxu0
          %v955 = vpop.f32.mrb[0].mxu0
          %v956 = vadd.f32 %v812, %v955
          %v957 = vpop.f32.mrb[0].mxu0
          %958 = vmatprep.mubr.bf16.mxu0 %v761
          %959 = vmatmul.mubr.bf16.gmra.mrb[0].mxu0 %v705
          %v960 = vpop.f32.mrb[0].mxu0
          %v961 = vadd.f32 %v812, %v960
          %v962 = vpop.f32.mrb[0].mxu0
          %v963 = vpop.f32.mrb[0].mxu0
          %v964 = vadd.f32 %v812, %v963
          %v965 = vpop.f32.mrb[0].mxu0
          %966 = vmatprep.mubr.bf16.mxu0 %v762
          %967 = vmatmul.mubr.bf16.gmra.mrb[0].mxu0 %v706
          %v968 = vpop.f32.mrb[0].mxu0
          %v969 = vadd.f32 %v812, %v968
          %v970 = vpop.f32.mrb[0].mxu0
          %v971 = vpop.f32.mrb[0].mxu0
          %v972 = vadd.f32 %v812, %v971
          %v973 = vpop.f32.mrb[0].mxu0
          %974 = vmatprep.mubr.bf16.mxu0 %v763
          %975 = vmatmul.mubr.bf16.gmra.mrb[0].mxu0 %v707
          %v976 = vpop.f32.mrb[0].mxu0
          %v977 = vadd.f32 %v812, %v976
          %v978 = vpop.f32.mrb[0].mxu0
          %v979 = vpop.f32.mrb[0].mxu0
          %v980 = vadd.f32 %v812, %v979
          %v981 = vpop.f32.mrb[0].mxu0
          %982 = vmatprep.mubr.bf16.mxu0 %v764
          %983 = vmatmul.mubr.bf16.gmra.mrb[0].mxu0 %v708
          %v984 = vpop.f32.mrb[0].mxu0
          %v985 = vadd.f32 %v812, %v984
          %v986 = vpop.f32.mrb[0].mxu0
          %v987 = vpop.f32.mrb[0].mxu0
          %v988 = vadd.f32 %v812, %v987
          %v989 = vpop.f32.mrb[0].mxu0
          %990 = vmatprep.mubr.bf16.mxu0 %v765
          %991 = vmatmul.mubr.bf16.gmra.mrb[0].mxu0 %v709
          %v992 = vpop.f32.mrb[0].mxu0
          %v993 = vadd.f32 %v812, %v992
          %v994 = vpop.f32.mrb[0].mxu0
          %v995 = vpop.f32.mrb[0].mxu0
          %v996 = vadd.f32 %v812, %v995
          %v997 = vpop.f32.mrb[0].mxu0
          %998 = vmatprep.mubr.bf16.mxu0 %v766
          %999 = vmatmul.mubr.bf16.gmra.mrb[0].mxu0 %v710
          %v1000 = vpop.f32.mrb[0].mxu0
          %v1001 = vadd.f32 %v812, %v1000
          %v1002 = vpop.f32.mrb[0].mxu0
          %v1003 = vpop.f32.mrb[0].mxu0
          %v1004 = vadd.f32 %v812, %v1003
          %v1005 = vpop.f32.mrb[0].mxu0
          %1006 = vdwg.mxu0
          %v1007 = vmax.f32 %v945, 0.0
          %v1008 = vmax.f32 %v948, 0.0
          %v1009 = vmax.f32 %v953, 0.0
          %v1010 = vmax.f32 %v956, 0.0
          %v1011 = vmax.f32 %v961, 0.0
          %v1012 = vmax.f32 %v964, 0.0
          %v1013 = vmax.f32 %v969, 0.0
          %v1014 = vmax.f32 %v972, 0.0
          %v1015 = vmax.f32 %v977, 0.0
          %v1016 = vmax.f32 %v980, 0.0
          %v1017 = vmax.f32 %v985, 0.0
          %v1018 = vmax.f32 %v988, 0.0
          %v1019 = vmax.f32 %v993, 0.0
          %v1020 = vmax.f32 %v996, 0.0
          %v1021 = vmax.f32 %v1001, 0.0
          %v1022 = vmax.f32 %v1004, 0.0
          %v1023 = vpack.c.bf16 %v1008, %v1007
          %v1024 = vpack.c.bf16 %v1010, %v1009
          %v1025 = vpack.c.bf16 %v1012, %v1011
          %v1026 = vpack.c.bf16 %v1014, %v1013
          %v1027 = vpack.c.bf16 %v1016, %v1015
          %v1028 = vpack.c.bf16 %v1018, %v1017
          %v1029 = vpack.c.bf16 %v1020, %v1019
          %v1030 = vpack.c.bf16 %v1022, %v1021
          %v1039 = vunpack.c.l.b16 %v1023
          %v1040 = vunpack.c.h.b16 %v1023
          %v1041 = vunpack.c.l.b16 %v1024
          %v1042 = vunpack.c.h.b16 %v1024
          %v1043 = vunpack.c.l.b16 %v1025
          %v1044 = vunpack.c.h.b16 %v1025
          %v1045 = vunpack.c.l.b16 %v1026
          %v1046 = vunpack.c.h.b16 %v1026
          %v1047 = vunpack.c.l.b16 %v1027
          %v1048 = vunpack.c.h.b16 %v1027
          %v1049 = vunpack.c.l.b16 %v1028
          %v1050 = vunpack.c.h.b16 %v1028
          %v1051 = vunpack.c.l.b16 %v1029
          %v1052 = vunpack.c.h.b16 %v1029
          %v1053 = vunpack.c.l.b16 %v1030
          %v1054 = vunpack.c.h.b16 %v1030
          %v1055 = vpack.c.b16 %v1039, %v1039
          %v1056 = vpack.c.b16 %v1040, %v1040
          %v1057 = vpack.c.b16 %v1041, %v1041
          %v1058 = vpack.c.b16 %v1042, %v1042
          %v1059 = vpack.c.b16 %v1043, %v1043
          %v1060 = vpack.c.b16 %v1044, %v1044
          %v1061 = vpack.c.b16 %v1045, %v1045
          %v1062 = vpack.c.b16 %v1046, %v1046
          %v1063 = vpack.c.b16 %v1047, %v1047
          %v1064 = vpack.c.b16 %v1048, %v1048
          %v1065 = vpack.c.b16 %v1049, %v1049
          %v1066 = vpack.c.b16 %v1050, %v1050
          %v1067 = vpack.c.b16 %v1051, %v1051
          %v1068 = vpack.c.b16 %v1052, %v1052
          %v1069 = vpack.c.b16 %v1053, %v1053
          %v1070 = vpack.c.b16 %v1054, %v1054
          %1087 = vst [vmem:[%s387] sm:$0xf] %v1055
          %1088 = vst [vmem:[%s387 + $0x4] sm:$0xf] %v1056
          %1089 = vst [vmem:[%s387 + $0x8] sm:$0xf] %v1057
          %1090 = vst [vmem:[%s387 + $0xc] sm:$0xf] %v1058
          %1091 = vst [vmem:[%s387 + $0x10] sm:$0xf] %v1059
          %1092 = vst [vmem:[%s387 + $0x14] sm:$0xf] %v1060
          %1093 = vst [vmem:[%s387 + $0x18] sm:$0xf] %v1061
          %1094 = vst [vmem:[%s387 + $0x1c] sm:$0xf] %v1062
          %1095 = vst [vmem:[%s387 + $0x20] sm:$0xf] %v1063
          %1096 = vst [vmem:[%s387 + $0x24] sm:$0xf] %v1064
          %1097 = vst [vmem:[%s387 + $0x28] sm:$0xf] %v1065
          %1098 = vst [vmem:[%s387 + $0x2c] sm:$0xf] %v1066
          %1099 = vst [vmem:[%s387 + $0x30] sm:$0xf] %v1067
          %1100 = vst [vmem:[%s387 + $0x34] sm:$0xf] %v1068
          %1101 = vst [vmem:[%s387 + $0x38] sm:$0xf] %v1069
          %1102 = vst [vmem:[%s387 + $0x3c] sm:$0xf] %v1070
        $region89: #{gnn_forward.2} parent=76 // pred_fallthru
          _
        %s1103 = smul.u32 16, %s20
        %p1104 = scmp.lt.s32.totalorder %s1103, 31
        %s1105 = scalar_select %p1104, %s1103, 31
        %s1106 = smul.addr %s1105, 4
        %s1107 = scalar_lea.vmem %s5, %s1106
        // Predicated region
        $region90: #{gnn_forward.2} parent=76 // pred_check
          %p1108 = pneg %p168
        $region91: #{gnn_forward.2} parent=76 // pred_check_branch
          %1110 = sbr.rel (%p1108) target = $region93
        $region92: #{gnn_forward.2} parent=76 // pred_region
          %s1111 = smul.u32 16, %s20
        $region93: #{gnn_forward.2} parent=76 // pred_fallthru
          _
      $region77: #{gnn_forward.2} parent=5 // pred_fallthru
        _
      %p1112 = scmp.le.s32.totalorder 2, %s11
      // Predicated region
      $region94: #{gnn_forward.2} parent=5 // pred_check
        %p1113 = pneg %p1112
      $region95: #{gnn_forward.2} parent=5 // pred_check_branch
        %1115 = sbr.rel (%p1113) target = $region97
      $region96: #{gnn_forward.2} parent=5 // pred_region
        %s1116 = ssub.s32 %s11, 2
        // Predicated region
        $region98: #{gnn_forward.2} parent=96 // pred_check
          %p1117 = pneg %p174
        $region99: #{gnn_forward.2} parent=96 // pred_check_branch
          %1119 = sbr.rel (%p1117) target = $region101
        $region100: #{gnn_forward.2} parent=96 // pred_region
          %s1120 = smul.u32 16, %s22
          %p1121 = scmp.lt.s32.totalorder %s1120, 31
          %s1122 = scalar_select %p1121, %s1120, 31
          %s1123 = smul.addr %s1122, 4
          %s1124 = scalar_lea.vmem %s5, %s1123
        $region101: #{gnn_forward.2} parent=96 // pred_fallthru
          _
      $region97: #{gnn_forward.2} parent=5 // pred_fallthru
        _
    $region6: #{gnn_forward.2} parent=1 // loop_footer
      %s15 = sadd.s32 1, %s11
    $region7: #{gnn_forward.2} parent=1 // loop_footer_branch
      %10 = sbr.rel target = $region3
    $region8: #{gnn_forward.2} parent=1 // loop_exit
      _

</llo_original>
